<compile_context>
chip_gen: v7x
topology: tpu7x:2x2x1
jax: 0.10.0
libtpu: 0.0.40
codegen_flags: <defaults>
</compile_context>

<pallas_src>
import numpy as np
import jax
import jax.numpy as jnp
from jax import lax
from jax.experimental import pallas as pl
from jax.experimental.pallas import tpu as pltpu


# ----------------------------------------------------------------------------
# Gaussian weights (same math as tensormonk.GaussianKernel)
# ----------------------------------------------------------------------------
def gaussian_kernel_np(sigma: float = 1.0, width: int = 0) -> np.ndarray:
    """2-D normalized Gaussian, identical to tensormonk GaussianKernel."""
    assert not ((width is None or width == 0) and (sigma is None or sigma == 0)), \
        "GaussianKernel :: both sigma & width are not valid"
    if width is None or width == 0:
        width = int(2.0 * 3.0 * sigma + 1.0)
    if width % 2 == 0:
        width += 1
    if sigma is None or sigma == 0:
        sigma = (width - 1) / 6.0
    half = width // 2
    x, y = np.meshgrid(np.linspace(-half, half, width),
                       np.linspace(-half, half, width), indexing="xy")
    w = np.exp(-(x ** 2 + y ** 2) / (2.0 * sigma ** 2))
    w /= np.sum(w)
    return w.astype(np.float32)


def gaussian_kernel_1d_np(sigma: float = 1.0, width: int = 0) -> np.ndarray:
    """Normalized 1-D Gaussian taps; outer(g1, g1) == 2-D kernel (separable)."""
    assert not ((width is None or width == 0) and (sigma is None or sigma == 0))
    if width is None or width == 0:
        width = int(2.0 * 3.0 * sigma + 1.0)
    if width % 2 == 0:
        width += 1
    if sigma is None or sigma == 0:
        sigma = (width - 1) / 6.0
    half = width // 2
    t = np.linspace(-half, half, width)
    g = np.exp(-(t ** 2) / (2.0 * sigma ** 2))
    g /= np.sum(g)
    return g.astype(np.float64)          # keep f64 while building band matrices


def _band_matrix(n: int, g1: np.ndarray) -> np.ndarray:
    """(n, n) banded Toeplitz M with M[i, i+d] = g1[pad+d].

    Bv @ X applies the vertical taps to rows, X @ Bh applies the horizontal
    taps to columns; entries outside the band are zero, which reproduces the
    zero-padding semantics of F.conv2d(padding=pad) with no explicit pad.
    """
    K = g1.shape[0]
    pad = K // 2
    M = np.zeros((n, n), np.float64)
    for d in range(-pad, pad + 1):
        if abs(d) < n:
            M += np.diag(np.full(n - abs(d), g1[pad + d]), k=d)
    return M


def _planes_per_block(n_planes: int, H: int) -> int:
    """Choose how many (H, W) planes each grid step processes.

    Constraints: chunk divides B*C, the row block Cb*H is sublane-aligned
    (multiple of 8) and <= 512 rows so the block-diagonal vertical matrix
    stays ~<= 1 MiB of VMEM.  Prefer an even grid extent >= 2 so both v7x
    TensorCores get work; otherwise take the biggest legal chunk.
    """
    cands = [d for d in range(1, n_planes + 1)
             if n_planes % d == 0 and (d * H) % 8 == 0 and d * H <= 512]
    if not cands:
        # TODO(synk): stripe very tall / oddly-shaped planes with halo tiles.
        return 1 if H % 8 == 0 else n_planes
    even = [d for d in cands if (n_planes // d) >= 2 and (n_planes // d) % 2 == 0]
    return max(even) if even else max(cands)


# ----------------------------------------------------------------------------
# Pallas kernel: two banded matmuls on the MXU (separable blur, implicit pad)
# ----------------------------------------------------------------------------
def _blur_kernel(x_ref, bv_ref, bh_ref, o_ref):
    # x_ref : (Cb*H, W)   row-stack of Cb whole planes
    # bv_ref: (Cb*H, Cb*H) block-diagonal banded Toeplitz (vertical taps)
    # bh_ref: (W, W)       banded Toeplitz (horizontal taps)
    x = x_ref[...].astype(jnp.float32)
    # Vertical 7-tap pass (per-plane, zero-pad implicit in the band).
    y = jnp.dot(bv_ref[...], x,
                precision=jax.lax.Precision.HIGHEST,
                preferred_element_type=jnp.float32)
    # Horizontal 7-tap pass.
    z = jnp.dot(y, bh_ref[...],
                precision=jax.lax.Precision.HIGHEST,
                preferred_element_type=jnp.float32)
    o_ref[...] = z.astype(o_ref.dtype)


def gaussian_blur(x: jax.Array, sigma: float = 1.0, width: int = 0) -> jax.Array:
    """Pallas TPU implementation of GaussianBlur.forward for NCHW input."""
    B, C, H, W = x.shape
    g1 = gaussian_kernel_1d_np(sigma, width)      # (K,) float64 taps
    N = B * C

    Cb = _planes_per_block(N, H)                  # planes per grid step
    R = Cb * H                                    # rows per block
    grid = (N // Cb,)

    # Static banded weight matrices, shipped once into VMEM and kept resident.
    bv = jnp.asarray(np.kron(np.eye(Cb), _band_matrix(H, g1)).astype(np.float32))
    bh = jnp.asarray(_band_matrix(W, g1).astype(np.float32))

    # Pure view: NCHW (row-major) -> (B*C*H, W); no HBM copy, no HBM pad.
    x2d = x.reshape(N * H, W)

    # Explicit scoped-VMEM budget (v5e default is only 16 MiB).
    need = 4 * (4 * R * W + 2 * R * R + 2 * W * W) + (1 << 20)
    vmem_limit = int(min(max(need, 16 * 1024 * 1024), 96 * 1024 * 1024))

    out2d = pl.pallas_call(
        _blur_kernel,
        out_shape=jax.ShapeDtypeStruct((N * H, W), x.dtype),
        grid_spec=pltpu.PrefetchScalarGridSpec(
            num_scalar_prefetch=0,
            grid=grid,
            in_specs=[
                pl.BlockSpec((R, W), lambda i: (i, 0)),   # plane-chunk rows
                pl.BlockSpec((R, R), lambda i: (0, 0)),   # Bv, resident
                pl.BlockSpec((W, W), lambda i: (0, 0)),   # Bh, resident
            ],
            out_specs=pl.BlockSpec((R, W), lambda i: (i, 0)),
        ),
        compiler_params=pltpu.CompilerParams(
            dimension_semantics=("parallel",),
            vmem_limit_bytes=vmem_limit,
        ),
    )(x2d, bv, bh)
    return out2d.reshape(B, C, H, W)


# ----------------------------------------------------------------------------
# Plain-JAX reference (identical to F.conv2d(..., padding=pad, groups=C))
# ----------------------------------------------------------------------------
def _reference_blur(x: jax.Array, sigma: float = 1.0, width: int = 0) -> jax.Array:
    B, C, H, W = x.shape
    wts = jnp.asarray(gaussian_kernel_np(sigma, width))
    K = wts.shape[0]
    pad = K // 2
    w = jnp.broadcast_to(wts[None, None, :, :], (C, 1, K, K))
    return lax.conv_general_dilated(
        x, w,
        window_strides=(1, 1),
        padding=((pad, pad), (pad, pad)),
        dimension_numbers=("NCHW", "OIHW", "NCHW"),
        feature_group_count=C,
    )


if __name__ == "__main__":
    key = jax.random.PRNGKey(0)
    x = jax.random.normal(key, (2, 4, 16, 16), dtype=jnp.float32)

    y = jax.block_until_ready(gaussian_blur(x, sigma=1.0, width=0))
    y_ref = jax.block_until_ready(_reference_blur(x, sigma=1.0, width=0))

    assert y.shape == x.shape and y.dtype == x.dtype
    np.testing.assert_allclose(np.asarray(y), np.asarray(y_ref),
                               rtol=1e-5, atol=2e-5)
    print("KERNEL_OK")
</pallas_src>

<mosaic_0001>
module attributes {stable_mosaic.version = 11 : i64} {
  func.func @_blur_kernel(%arg0: i32, %arg1: memref<64x16xf32, #tpu.memory_space<vmem>>, %arg2: memref<64x64xf32, #tpu.memory_space<vmem>>, %arg3: memref<16x16xf32, #tpu.memory_space<vmem>>, %arg4: memref<64x16xf32, #tpu.memory_space<vmem>>) attributes {dimension_semantics = [#tpu.dimension_semantics<parallel>], iteration_bounds = array<i64: 2>, scalar_prefetch = 0 : i64, scratch_operands = 0 : i64, tpu.core_type = #tpu.core_type<tc>, window_params = [{transform_indices = @transform_0, window_bounds = array<i64: 64, 16>}, {pipeline_mode = #tpu.pipeline_mode<synchronous>, transform_indices = @transform_1, window_bounds = array<i64: 64, 64>}, {pipeline_mode = #tpu.pipeline_mode<synchronous>, transform_indices = @transform_2, window_bounds = array<i64: 16, 16>}, {transform_indices = @transform_3, window_bounds = array<i64: 64, 16>}]} {
    %c0 = arith.constant 0 : index
    %c0_0 = arith.constant 0 : index
    %0 = vector.load %arg1[%c0, %c0_0] : memref<64x16xf32, #tpu.memory_space<vmem>>, vector<64x16xf32>
    %c0_1 = arith.constant 0 : index
    %c0_2 = arith.constant 0 : index
    %1 = vector.load %arg2[%c0_1, %c0_2] : memref<64x64xf32, #tpu.memory_space<vmem>>, vector<64x64xf32>
    %cst = arith.constant dense<0.000000e+00> : vector<64x16xf32>
    %2 = tpu.matmul %1, %0, %cst {dimension_numbers = #tpu.dot_dimension_numbers<[1], [0], [0], [1], [0, 0, 1, 1], [], []>, precision = #tpu.contract_precision<fp32>} : vector<64x64xf32>, vector<64x16xf32>, vector<64x16xf32> -> vector<64x16xf32>
    %c0_3 = arith.constant 0 : index
    %c0_4 = arith.constant 0 : index
    %3 = vector.load %arg3[%c0_3, %c0_4] : memref<16x16xf32, #tpu.memory_space<vmem>>, vector<16x16xf32>
    %cst_5 = arith.constant dense<0.000000e+00> : vector<64x16xf32>
    %4 = tpu.matmul %2, %3, %cst_5 {dimension_numbers = #tpu.dot_dimension_numbers<[1], [0], [0], [1], [0, 0, 1, 1], [], []>, precision = #tpu.contract_precision<fp32>} : vector<64x16xf32>, vector<16x16xf32>, vector<64x16xf32> -> vector<64x16xf32>
    %c0_6 = arith.constant 0 : index
    %c0_7 = arith.constant 0 : index
    %5 = vector.load %arg4[%c0_6, %c0_7] : memref<64x16xf32, #tpu.memory_space<vmem>>, vector<64x16xf32>
    tpu.vector_store %arg4[%c0_6, %c0_7], %4 {strides = array<i32>} : memref<64x16xf32, #tpu.memory_space<vmem>>, vector<64x16xf32>,
    return
  }
  func.func @transform_0(%arg0: i32) -> (i32, i32) {
    %c0_i32 = arith.constant 0 : i32
    %c0_i32_0 = arith.constant 0 : i32
    return %arg0, %c0_i32 : i32, i32
  }
  func.func @transform_1(%arg0: i32) -> (i32, i32) {
    %c0_i32 = arith.constant 0 : i32
    %c0_i32_0 = arith.constant 0 : i32
    %c0_i32_1 = arith.constant 0 : i32
    return %c0_i32, %c0_i32_0 : i32, i32
  }
  func.func @transform_2(%arg0: i32) -> (i32, i32) {
    %c0_i32 = arith.constant 0 : i32
    %c0_i32_0 = arith.constant 0 : i32
    %c0_i32_1 = arith.constant 0 : i32
    return %c0_i32, %c0_i32_0 : i32, i32
  }
  func.func @transform_3(%arg0: i32) -> (i32, i32) {
    %c0_i32 = arith.constant 0 : i32
    %c0_i32_0 = arith.constant 0 : i32
    return %arg0, %c0_i32 : i32, i32
  }
}

</mosaic_0001>

<llo_original>
// kernel: tpu_custom_call.1
$region0: #{tpu_custom_call.1}
  #allocation0 [shape = 'u32[]', space=smem, size = 0x4, offset = 0x4, fixed_abs, tag = 'smem constant byte address 0x4 - core index']
  #allocation1 [shape = 'u32[144,128]{1,0:T(1,128)}', space=vmem, size = 0x12000, scoped, tag = 'internal scratch']
  %s0 = inlined_call_operand.vmem [shape: f32[128,16], index: 0, kind: input, shape index: {}]
  %s1 = inlined_call_operand.vmem [shape: f32[64,64], index: 1, kind: input, shape index: {}]
  %s2 = inlined_call_operand.vmem [shape: f32[16,16], index: 2, kind: input, shape index: {}]
  %s3 = inlined_call_operand.vmem [shape: f32[128,16], index: 3, kind: output, shape index: {}]
  %s4 = sld [smem:[#allocation0]]
  $region45: #{tpu_custom_call.1} parent=0
    _
  %s6 = ssub.s32 1, %s4
  %s7 = scalar_select 0, %s6, %s4
  loop: start=0, step=1, limit=4
  $region2: #{tpu_custom_call.1} parent=0 // loop_pre_header
    _
  $region3: #{tpu_custom_call.1} parent=0 // loop_header
    %s9 = sphi 0, %s13
    %p10 = scmp.ge.s32.totalorder %s9, 4
    %s19 = sphi 0, %s21
    %s22 = sphi 0, %s19
    %s23 = sphi 0, %s22
    %s39 = sphi 0, %s23
    %s43 = sphi 0, %s43
    %s45 = sphi 0, %s43
    %s46 = sphi 0, %s45
    %s60 = sphi 0, %s46
    %s64 = sphi 0, %s64
    %s66 = sphi 0, %s64
    %s67 = sphi 0, %s66
    %s81 = sphi 0, %s67
    %s87 = sphi 0, %s89
    %s90 = sphi 0, %s87
    %s91 = sphi 0, %s90
    %s107 = sphi 0, %s91
  $region4: #{tpu_custom_call.1} parent=0 // loop_header_branch
    %12 = sbr.rel (%p10) target = $region8
  $region5: #{tpu_custom_call.1} parent=0 // loop_body
    %s14 = ssub.s32 %s9, 1
    %s15 = ssub.s32 %s9, 2
    %s16 = sadd.s32 %s9, 1
    %s17 = ssub.s32 %s9, %s16
    %p18 = scmp.eq.s32.totalorder %s17, 0
    %s20 = sadd.s32 %s19, 1
    %s21 = scalar_select %p18, %s19, %s20
    %p24 = pneg %p18
    %p25 = scmp.eq.s32.totalorder %s9, 1
    %p26 = por %p24, %p25
    %p27 = scmp.ne.s32.totalorder %s19, %s22
    %p28 = scmp.eq.s32.totalorder %s9, 0
    %p29 = por %p27, %p28
    %p30 = scmp.ne.s32.totalorder %s19, %s22
    %p31 = scmp.eq.s32.totalorder %s14, 1
    %p32 = por %p30, %p31
    %p33 = scmp.ne.s32.totalorder %s22, %s23
    %p34 = scmp.eq.s32.totalorder %s14, 0
    %p35 = por %p33, %p34
    %p36 = scmp.ne.s32.totalorder %s22, %s23
    %p37 = scmp.eq.s32.totalorder %s15, 1
    %p38 = por %p36, %p37
    %p40 = scmp.ne.s32.totalorder %s23, %s39
    %p41 = scmp.eq.s32.totalorder %s15, 0
    %p42 = por %p40, %p41
    %s44 = sadd.s32 %s43, 1
    %p47 = scmp.eq.s32.totalorder %s9, 1
    %p48 = scmp.ne.s32.totalorder %s43, %s45
    %p49 = scmp.eq.s32.totalorder %s9, 0
    %p50 = por %p48, %p49
    %p51 = scmp.ne.s32.totalorder %s43, %s45
    %p52 = scmp.eq.s32.totalorder %s14, 1
    %p53 = por %p51, %p52
    %p54 = scmp.ne.s32.totalorder %s45, %s46
    %p55 = scmp.eq.s32.totalorder %s14, 0
    %p56 = por %p54, %p55
    %p57 = scmp.ne.s32.totalorder %s45, %s46
    %p58 = scmp.eq.s32.totalorder %s15, 1
    %p59 = por %p57, %p58
    %p61 = scmp.ne.s32.totalorder %s46, %s60
    %p62 = scmp.eq.s32.totalorder %s15, 0
    %p63 = por %p61, %p62
    %s65 = sadd.s32 %s64, 1
    %p68 = scmp.eq.s32.totalorder %s9, 1
    %p69 = scmp.ne.s32.totalorder %s64, %s66
    %p70 = scmp.eq.s32.totalorder %s9, 0
    %p71 = por %p69, %p70
    %p72 = scmp.ne.s32.totalorder %s64, %s66
    %p73 = scmp.eq.s32.totalorder %s14, 1
    %p74 = por %p72, %p73
    %p75 = scmp.ne.s32.totalorder %s66, %s67
    %p76 = scmp.eq.s32.totalorder %s14, 0
    %p77 = por %p75, %p76
    %p78 = scmp.ne.s32.totalorder %s66, %s67
    %p79 = scmp.eq.s32.totalorder %s15, 1
    %p80 = por %p78, %p79
    %p82 = scmp.ne.s32.totalorder %s67, %s81
    %p83 = scmp.eq.s32.totalorder %s15, 0
    %p84 = por %p82, %p83
    %s85 = ssub.s32 %s9, %s16
    %p86 = scmp.eq.s32.totalorder %s85, 0
    %s88 = sadd.s32 %s87, 1
    %s89 = scalar_select %p86, %s87, %s88
    %p92 = pneg %p86
    %p93 = scmp.eq.s32.totalorder %s9, 1
    %p94 = por %p92, %p93
    %p95 = scmp.ne.s32.totalorder %s87, %s90
    %p96 = scmp.eq.s32.totalorder %s9, 0
    %p97 = por %p95, %p96
    %p98 = scmp.ne.s32.totalorder %s87, %s90
    %p99 = scmp.eq.s32.totalorder %s14, 1
    %p100 = por %p98, %p99
    %p101 = scmp.ne.s32.totalorder %s90, %s91
    %p102 = scmp.eq.s32.totalorder %s14, 0
    %p103 = por %p101, %p102
    %p104 = scmp.ne.s32.totalorder %s90, %s91
    %p105 = scmp.eq.s32.totalorder %s15, 1
    %p106 = por %p104, %p105
    %p108 = scmp.ne.s32.totalorder %s91, %s107
    %p109 = scmp.eq.s32.totalorder %s15, 0
    %p110 = por %p108, %p109
    %p111 = scmp.le.s32.totalorder 1, %s9
    %p112 = scmp.lt.s32.totalorder %s9, 3
    %p113 = pnand %p111, %p112
    %p114 = pneg %p113
    // Predicated region
    $region9: #{tpu_custom_call.1} parent=5 // pred_check
      _
    $region10: #{tpu_custom_call.1} parent=5 // pred_check_branch
      %116 = sbr.rel (%p113) target = $region12
    $region11: #{tpu_custom_call.1} parent=5 // pred_region
      %s117 = ssub.s32 %s9, 1
      // Predicated region
      $region13: #{tpu_custom_call.1} parent=11 // pred_check
        %p118 = pneg %p56
      $region14: #{tpu_custom_call.1} parent=11 // pred_check_branch
        %120 = sbr.rel (%p118) target = $region16
      $region15: #{tpu_custom_call.1} parent=11 // pred_region
        _
      $region16: #{tpu_custom_call.1} parent=11 // pred_fallthru
        _
      // Predicated region
      $region17: #{tpu_custom_call.1} parent=11 // pred_check
        %p121 = pneg %p77
      $region18: #{tpu_custom_call.1} parent=11 // pred_check_branch
        %123 = sbr.rel (%p121) target = $region20
      $region19: #{tpu_custom_call.1} parent=11 // pred_region
        _
      $region20: #{tpu_custom_call.1} parent=11 // pred_fallthru
        _
    $region12: #{tpu_custom_call.1} parent=5 // pred_fallthru
      _
    %p124 = scmp.lt.s32.totalorder %s9, 2
    // Predicated region
    $region21: #{tpu_custom_call.1} parent=5 // pred_check
      %p125 = pneg %p124
    $region22: #{tpu_custom_call.1} parent=5 // pred_check_branch
      %127 = sbr.rel (%p125) target = $region24
    $region23: #{tpu_custom_call.1} parent=5 // pred_region
      // Predicated region
      $region25: #{tpu_custom_call.1} parent=23 // pred_check
        %p128 = pneg %p29
      $region26: #{tpu_custom_call.1} parent=23 // pred_check_branch
        %130 = sbr.rel (%p128) target = $region28
      $region27: #{tpu_custom_call.1} parent=23 // pred_region
        %s131 = smul.u32 8, %s9
        %p132 = scmp.lt.s32.totalorder %s131, 15
        %s133 = scalar_select %p132, %s131, 15
        %s134 = smul.addr %s133, 8
        %s135 = scalar_lea.vmem %s0, %s134
        %s136 = smul.u32 8, %s9
      $region28: #{tpu_custom_call.1} parent=23 // pred_fallthru
        _
    $region24: #{tpu_custom_call.1} parent=5 // pred_fallthru
      _
    %p137 = scmp.le.s32.totalorder 1, %s9
    %p138 = scmp.lt.s32.totalorder %s9, 3
    %p139 = pnand %p137, %p138
    %p140 = pneg %p139
    // Predicated region
    $region29: #{tpu_custom_call.1} parent=5 // pred_check
      _
    $region30: #{tpu_custom_call.1} parent=5 // pred_check_branch
      %142 = sbr.rel (%p139) target = $region32
    $region31: #{tpu_custom_call.1} parent=5 // pred_region
      %s143 = ssub.s32 %s9, 1
      %s144 = smul.u32 8, %s14
      %p145 = scmp.lt.s32.totalorder %s144, 15
      %s146 = scalar_select %p145, %s144, 15
      %s147 = smul.addr %s146, 8
      %s148 = scalar_lea.vmem %s0, %s147
      %p149 = pneg %p35
      %p150 = pneg %p32
      %p151 = pneg %p56
      %p152 = pneg %p53
      %p153 = pneg %p77
      %p154 = pneg %p74
      %p155 = pneg %p103
      %p156 = pneg %p100
      %s157 = smul.u32 8, %s14
      %p158 = scmp.lt.s32.totalorder %s157, 15
      %s159 = scalar_select %p158, %s157, 15
      %s160 = smul.addr %s159, 8
      %s161 = scalar_lea.vmem %s3, %s160
      %s162 = smul.u32 8, %s14
      %p163 = scmp.lt.s32.totalorder %s162, 15
      %s164 = scalar_select %p163, %s162, 15
      %s165 = smul.addr %s164, 8
      %s166 = scalar_lea.vmem %s0, %s165
      %s167 = smul.u32 8, %s14
      %s168 = smul.u32 8, %s14
      %p169 = scmp.lt.s32.totalorder %s168, 15
      %s170 = scalar_select %p169, %s168, 15
      %s171 = smul.addr %s170, 8
      %s172 = scalar_lea.vmem %s3, %s171
      %s173 = smul.u32 8, %s14
      %v174 = vld [vmem:[%s166] sm:$0xff]
      %v175 = vld [vmem:[%s166 + $0x8] sm:$0xff]
      %v176 = vld [vmem:[%s166 + $0x10] sm:$0xff]
      %v177 = vld [vmem:[%s166 + $0x18] sm:$0xff]
      %v178 = vld [vmem:[%s166 + $0x20] sm:$0xff]
      %v179 = vld [vmem:[%s166 + $0x28] sm:$0xff]
      %v180 = vld [vmem:[%s166 + $0x30] sm:$0xff]
      %v181 = vld [vmem:[%s166 + $0x38] sm:$0xff]
      %v182 = vld [vmem:[%s1] sm:$0xff]
      %v183 = vld [vmem:[%s1 + $0x8] sm:$0xff]
      %v184 = vld [vmem:[%s1 + $0x10] sm:$0xff]
      %v185 = vld [vmem:[%s1 + $0x18] sm:$0xff]
      %v186 = vld [vmem:[%s1 + $0x20] sm:$0xff]
      %v187 = vld [vmem:[%s1 + $0x28] sm:$0xff]
      %v188 = vld [vmem:[%s1 + $0x30] sm:$0xff]
      %v189 = vld [vmem:[%s1 + $0x38] sm:$0xff]
      %vm190 = vcmask 523264
      %v192 = vsel %vm190, %v182, 0
      %v195 = vsel %vm190, %v183, 0
      %v198 = vsel %vm190, %v184, 0
      %v201 = vsel %vm190, %v185, 0
      %v204 = vsel %vm190, %v186, 0
      %v207 = vsel %vm190, %v187, 0
      %v210 = vsel %vm190, %v188, 0
      %v213 = vsel %vm190, %v189, 0
      %215 = vmatprep.subr.mxu0 0.0
      %v216 = vand.u32 %v174, 4294901760
      %217 = vmatpush1.msra.mxu0 %v216
      %218 = vmatprep.subr.mxu0 0.0
      %v219 = vand.u32 %v175, 4294901760
      %220 = vmatpush1.msra.mxu0 %v219
      %221 = vmatprep.subr.mxu0 0.0
      %v222 = vand.u32 %v176, 4294901760
      %223 = vmatpush1.msra.mxu0 %v222
      %224 = vmatprep.subr.mxu0 0.0
      %v225 = vand.u32 %v177, 4294901760
      %226 = vmatpush1.msra.mxu0 %v225
      %227 = vmatprep.subr.mxu0 0.0
      %v228 = vand.u32 %v178, 4294901760
      %229 = vmatpush1.msra.mxu0 %v228
      %230 = vmatprep.subr.mxu0 0.0
      %v231 = vand.u32 %v179, 4294901760
      %232 = vmatpush1.msra.mxu0 %v231
      %233 = vmatprep.subr.mxu0 0.0
      %v234 = vand.u32 %v180, 4294901760
      %235 = vmatpush1.msra.mxu0 %v234
      %236 = vmatprep.subr.mxu0 0.0
      %v237 = vand.u32 %v181, 4294901760
      %238 = vmatpush1.msra.mxu0 %v237
      %239 = vmatprep.subr.mxu0 0.0
      %240 = vmatpush1.msra.mxu0 0.0
      %241 = vmatprep.subr.mxu0 0.0
      %242 = vmatpush1.msra.mxu0 0.0
      %243 = vmatprep.subr.mxu0 0.0
      %244 = vmatpush1.msra.mxu0 0.0
      %245 = vmatprep.subr.mxu0 0.0
      %246 = vmatpush1.msra.mxu0 0.0
      %247 = vmatprep.subr.mxu0 0.0
      %248 = vmatpush1.msra.mxu0 0.0
      %249 = vmatprep.subr.mxu0 0.0
      %250 = vmatpush1.msra.mxu0 0.0
      %251 = vmatprep.subr.mxu0 0.0
      %252 = vmatpush1.msra.mxu0 0.0
      %253 = vmatprep.subr.mxu0 0.0
      %254 = vmatpush1.msra.mxu0 0.0
      %255 = vmatprep.subr.mxu0 0.0
      %256 = vmatpush1.msra.mxu0 0.0
      %257 = vmatprep.subr.mxu0 0.0
      %258 = vmatpush1.msra.mxu0 0.0
      %259 = vmatprep.subr.mxu0 0.0
      %260 = vmatpush1.msra.mxu0 0.0
      %261 = vmatprep.subr.mxu0 0.0
      %262 = vmatpush1.msra.mxu0 0.0
      %263 = vmatprep.subr.mxu0 0.0
      %264 = vmatpush1.msra.mxu0 0.0
      %265 = vmatprep.subr.mxu0 0.0
      %266 = vmatpush1.msra.mxu0 0.0
      %267 = vmatprep.subr.mxu0 0.0
      %268 = vmatpush1.msra.mxu0 0.0
      %269 = vmatprep.subr.mxu0 0.0
      %270 = vmatpush1.msra.mxu0 0.0
      %271 = vmatprep.subr.mxu0 0.0
      %272 = vmatpush1.msra.mxu0 0.0
      %273 = vmatprep.subr.mxu0 0.0
      %274 = vmatpush1.msra.mxu0 0.0
      %275 = vmatprep.subr.mxu0 0.0
      %276 = vmatpush1.msra.mxu0 0.0
      %277 = vmatprep.subr.mxu0 0.0
      %278 = vmatpush1.msra.mxu0 0.0
      %279 = vmatprep.subr.mxu0 0.0
      %280 = vmatpush1.msra.mxu0 0.0
      %281 = vmatprep.subr.mxu0 0.0
      %282 = vmatpush1.msra.mxu0 0.0
      %283 = vmatprep.subr.mxu0 0.0
      %284 = vmatpush1.msra.mxu0 0.0
      %285 = vmatprep.subr.mxu0 0.0
      %286 = vmatpush1.msra.mxu0 0.0
      %287 = vmatprep.mubr.f32.mxu0 0.0
      %v288 = vand.u32 %v192, 4294901760
      %v289 = vsub.f32 %v192, %v288
      %v290 = vand.u32 %v289, 4294901760
      %v291 = vsub.f32 %v289, %v290
      %v292 = vand.u32 %v291, 4294901760
      %293 = vmatmul.mubr.f32.gmra.mrb[0].mxu0 %v292
      %v294 = vpop.f32.mrb[0].mxu0
      %v295 = vadd.f32 0.0, %v294
      %v296 = vpop.f32.mrb[0].mxu0
      %297 = vmatprep.mubr.f32.mxu0 0.0
      %v298 = vand.u32 %v195, 4294901760
      %v299 = vsub.f32 %v195, %v298
      %v300 = vand.u32 %v299, 4294901760
      %v301 = vsub.f32 %v299, %v300
      %v302 = vand.u32 %v301, 4294901760
      %303 = vmatmul.mubr.f32.gmra.mrb[0].mxu0 %v302
      %v304 = vpop.f32.mrb[0].mxu0
      %v305 = vadd.f32 0.0, %v304
      %v306 = vpop.f32.mrb[0].mxu0
      %307 = vmatprep.mubr.f32.mxu0 0.0
      %v308 = vand.u32 %v198, 4294901760
      %v309 = vsub.f32 %v198, %v308
      %v310 = vand.u32 %v309, 4294901760
      %v311 = vsub.f32 %v309, %v310
      %v312 = vand.u32 %v311, 4294901760
      %313 = vmatmul.mubr.f32.gmra.mrb[0].mxu0 %v312
      %v314 = vpop.f32.mrb[0].mxu0
      %v315 = vadd.f32 0.0, %v314
      %v316 = vpop.f32.mrb[0].mxu0
      %317 = vmatprep.mubr.f32.mxu0 0.0
      %v318 = vand.u32 %v201, 4294901760
      %v319 = vsub.f32 %v201, %v318
      %v320 = vand.u32 %v319, 4294901760
      %v321 = vsub.f32 %v319, %v320
      %v322 = vand.u32 %v321, 4294901760
      %323 = vmatmul.mubr.f32.gmra.mrb[0].mxu0 %v322
      %v324 = vpop.f32.mrb[0].mxu0
      %v325 = vadd.f32 0.0, %v324
      %v326 = vpop.f32.mrb[0].mxu0
      %327 = vmatprep.mubr.f32.mxu0 0.0
      %v328 = vand.u32 %v204, 4294901760
      %v329 = vsub.f32 %v204, %v328
      %v330 = vand.u32 %v329, 4294901760
      %v331 = vsub.f32 %v329, %v330
      %v332 = vand.u32 %v331, 4294901760
      %333 = vmatmul.mubr.f32.gmra.mrb[0].mxu0 %v332
      %v334 = vpop.f32.mrb[0].mxu0
      %v335 = vadd.f32 0.0, %v334
      %v336 = vpop.f32.mrb[0].mxu0
      %337 = vmatprep.mubr.f32.mxu0 0.0
      %v338 = vand.u32 %v207, 4294901760
      %v339 = vsub.f32 %v207, %v338
      %v340 = vand.u32 %v339, 4294901760
      %v341 = vsub.f32 %v339, %v340
      %v342 = vand.u32 %v341, 4294901760
      %343 = vmatmul.mubr.f32.gmra.mrb[0].mxu0 %v342
      %v344 = vpop.f32.mrb[0].mxu0
      %v345 = vadd.f32 0.0, %v344
      %v346 = vpop.f32.mrb[0].mxu0
      %347 = vmatprep.mubr.f32.mxu0 0.0
      %v348 = vand.u32 %v210, 4294901760
      %v349 = vsub.f32 %v210, %v348
      %v350 = vand.u32 %v349, 4294901760
      %v351 = vsub.f32 %v349, %v350
      %v352 = vand.u32 %v351, 4294901760
      %353 = vmatmul.mubr.f32.gmra.mrb[0].mxu0 %v352
      %v354 = vpop.f32.mrb[0].mxu0
      %v355 = vadd.f32 0.0, %v354
      %v356 = vpop.f32.mrb[0].mxu0
      %357 = vmatprep.mubr.f32.mxu0 0.0
      %v358 = vand.u32 %v213, 4294901760
      %v359 = vsub.f32 %v213, %v358
      %v360 = vand.u32 %v359, 4294901760
      %v361 = vsub.f32 %v359, %v360
      %v362 = vand.u32 %v361, 4294901760
      %363 = vmatmul.mubr.f32.gmra.mrb[0].mxu0 %v362
      %v364 = vpop.f32.mrb[0].mxu0
      %v365 = vadd.f32 0.0, %v364
      %v366 = vpop.f32.mrb[0].mxu0
      %367 = vdwg.mxu0
      %368 = vmatprep.subr.mxu0 0.0
      %v369 = vand.u32 %v174, 4294901760
      %v370 = vsub.f32 %v174, %v369
      %v371 = vand.u32 %v370, 4294901760
      %v372 = vsub.f32 %v370, %v371
      %v373 = vand.u32 %v372, 4294901760
      %374 = vmatpush1.msra.mxu0 %v373
      %375 = vmatprep.subr.mxu0 0.0
      %v376 = vand.u32 %v175, 4294901760
      %v377 = vsub.f32 %v175, %v376
      %v378 = vand.u32 %v377, 4294901760
      %v379 = vsub.f32 %v377, %v378
      %v380 = vand.u32 %v379, 4294901760
      %381 = vmatpush1.msra.mxu0 %v380
      %382 = vmatprep.subr.mxu0 0.0
      %v383 = vand.u32 %v176, 4294901760
      %v384 = vsub.f32 %v176, %v383
      %v385 = vand.u32 %v384, 4294901760
      %v386 = vsub.f32 %v384, %v385
      %v387 = vand.u32 %v386, 4294901760
      %388 = vmatpush1.msra.mxu0 %v387
      %389 = vmatprep.subr.mxu0 0.0
      %v390 = vand.u32 %v177, 4294901760
      %v391 = vsub.f32 %v177, %v390
      %v392 = vand.u32 %v391, 4294901760
      %v393 = vsub.f32 %v391, %v392
      %v394 = vand.u32 %v393, 4294901760
      %395 = vmatpush1.msra.mxu0 %v394
      %396 = vmatprep.subr.mxu0 0.0
      %v397 = vand.u32 %v178, 4294901760
      %v398 = vsub.f32 %v178, %v397
      %v399 = vand.u32 %v398, 4294901760
      %v400 = vsub.f32 %v398, %v399
      %v401 = vand.u32 %v400, 4294901760
      %402 = vmatpush1.msra.mxu0 %v401
      %403 = vmatprep.subr.mxu0 0.0
      %v404 = vand.u32 %v179, 4294901760
      %v405 = vsub.f32 %v179, %v404
      %v406 = vand.u32 %v405, 4294901760
      %v407 = vsub.f32 %v405, %v406
      %v408 = vand.u32 %v407, 4294901760
      %409 = vmatpush1.msra.mxu0 %v408
      %410 = vmatprep.subr.mxu0 0.0
      %v411 = vand.u32 %v180, 4294901760
      %v412 = vsub.f32 %v180, %v411
      %v413 = vand.u32 %v412, 4294901760
      %v414 = vsub.f32 %v412, %v413
      %v415 = vand.u32 %v414, 4294901760
      %416 = vmatpush1.msra.mxu0 %v415
      %417 = vmatprep.subr.mxu0 0.0
      %v418 = vand.u32 %v181, 4294901760
      %v419 = vsub.f32 %v181, %v418
      %v420 = vand.u32 %v419, 4294901760
      %v421 = vsub.f32 %v419, %v420
      %v422 = vand.u32 %v421, 4294901760
      %423 = vmatpush1.msra.mxu0 %v422
      %424 = vmatprep.subr.mxu0 0.0
      %425 = vmatpush1.msra.mxu0 0.0
      %426 = vmatprep.subr.mxu0 0.0
      %427 = vmatpush1.msra.mxu0 0.0
      %428 = vmatprep.subr.mxu0 0.0
      %429 = vmatpush1.msra.mxu0 0.0
      %430 = vmatprep.subr.mxu0 0.0
      %431 = vmatpush1.msra.mxu0 0.0
      %432 = vmatprep.subr.mxu0 0.0
      %433 = vmatpush1.msra.mxu0 0.0
      %434 = vmatprep.subr.mxu0 0.0
      %435 = vmatpush1.msra.mxu0 0.0
      %436 = vmatprep.subr.mxu0 0.0
      %437 = vmatpush1.msra.mxu0 0.0
      %438 = vmatprep.subr.mxu0 0.0
      %439 = vmatpush1.msra.mxu0 0.0
      %440 = vmatprep.subr.mxu0 0.0
      %441 = vmatpush1.msra.mxu0 0.0
      %442 = vmatprep.subr.mxu0 0.0
      %443 = vmatpush1.msra.mxu0 0.0
      %444 = vmatprep.subr.mxu0 0.0
      %445 = vmatpush1.msra.mxu0 0.0
      %446 = vmatprep.subr.mxu0 0.0
      %447 = vmatpush1.msra.mxu0 0.0
      %448 = vmatprep.subr.mxu0 0.0
      %449 = vmatpush1.msra.mxu0 0.0
      %450 = vmatprep.subr.mxu0 0.0
      %451 = vmatpush1.msra.mxu0 0.0
      %452 = vmatprep.subr.mxu0 0.0
      %453 = vmatpush1.msra.mxu0 0.0
      %454 = vmatprep.subr.mxu0 0.0
      %455 = vmatpush1.msra.mxu0 0.0
      %456 = vmatprep.subr.mxu0 0.0
      %457 = vmatpush1.msra.mxu0 0.0
      %458 = vmatprep.subr.mxu0 0.0
      %459 = vmatpush1.msra.mxu0 0.0
      %460 = vmatprep.subr.mxu0 0.0
      %461 = vmatpush1.msra.mxu0 0.0
      %462 = vmatprep.subr.mxu0 0.0
      %463 = vmatpush1.msra.mxu0 0.0
      %464 = vmatprep.subr.mxu0 0.0
      %465 = vmatpush1.msra.mxu0 0.0
      %466 = vmatprep.subr.mxu0 0.0
      %467 = vmatpush1.msra.mxu0 0.0
      %468 = vmatprep.subr.mxu0 0.0
      %469 = vmatpush1.msra.mxu0 0.0
      %470 = vmatprep.subr.mxu0 0.0
      %471 = vmatpush1.msra.mxu0 0.0
      %472 = vmatprep.mubr.f32.mxu0 0.0
      %v473 = vand.u32 %v192, 4294901760
      %474 = vmatmul.mubr.f32.gmra.mrb[0].mxu0 %v473
      %v475 = vpop.f32.mrb[0].mxu0
      %v476 = vadd.f32 %v295, %v475
      %v477 = vpop.f32.mrb[0].mxu0
      %478 = vmatprep.mubr.f32.mxu0 0.0
      %v479 = vand.u32 %v195, 4294901760
      %480 = vmatmul.mubr.f32.gmra.mrb[0].mxu0 %v479
      %v481 = vpop.f32.mrb[0].mxu0
      %v482 = vadd.f32 %v305, %v481
      %v483 = vpop.f32.mrb[0].mxu0
      %484 = vmatprep.mubr.f32.mxu0 0.0
      %v485 = vand.u32 %v198, 4294901760
      %486 = vmatmul.mubr.f32.gmra.mrb[0].mxu0 %v485
      %v487 = vpop.f32.mrb[0].mxu0
      %v488 = vadd.f32 %v315, %v487
      %v489 = vpop.f32.mrb[0].mxu0
      %490 = vmatprep.mubr.f32.mxu0 0.0
      %v491 = vand.u32 %v201, 4294901760
      %492 = vmatmul.mubr.f32.gmra.mrb[0].mxu0 %v491
      %v493 = vpop.f32.mrb[0].mxu0
      %v494 = vadd.f32 %v325, %v493
      %v495 = vpop.f32.mrb[0].mxu0
      %496 = vmatprep.mubr.f32.mxu0 0.0
      %v497 = vand.u32 %v204, 4294901760
      %498 = vmatmul.mubr.f32.gmra.mrb[0].mxu0 %v497
      %v499 = vpop.f32.mrb[0].mxu0
      %v500 = vadd.f32 %v335, %v499
      %v501 = vpop.f32.mrb[0].mxu0
      %502 = vmatprep.mubr.f32.mxu0 0.0
      %v503 = vand.u32 %v207, 4294901760
      %504 = vmatmul.mubr.f32.gmra.mrb[0].mxu0 %v503
      %v505 = vpop.f32.mrb[0].mxu0
      %v506 = vadd.f32 %v345, %v505
      %v507 = vpop.f32.mrb[0].mxu0
      %508 = vmatprep.mubr.f32.mxu0 0.0
      %v509 = vand.u32 %v210, 4294901760
      %510 = vmatmul.mubr.f32.gmra.mrb[0].mxu0 %v509
      %v511 = vpop.f32.mrb[0].mxu0
      %v512 = vadd.f32 %v355, %v511
      %v513 = vpop.f32.mrb[0].mxu0
      %514 = vmatprep.mubr.f32.mxu0 0.0
      %v515 = vand.u32 %v213, 4294901760
      %516 = vmatmul.mubr.f32.gmra.mrb[0].mxu0 %v515
      %v517 = vpop.f32.mrb[0].mxu0
      %v518 = vadd.f32 %v365, %v517
      %v519 = vpop.f32.mrb[0].mxu0
      %520 = vdwg.mxu0
      %521 = vmatprep.subr.mxu0 0.0
      %v522 = vand.u32 %v174, 4294901760
      %v523 = vsub.f32 %v174, %v522
      %524 = vmatpush1.msra.mxu0 %v523
      %525 = vmatprep.subr.mxu0 0.0
      %v526 = vand.u32 %v175, 4294901760
      %v527 = vsub.f32 %v175, %v526
      %528 = vmatpush1.msra.mxu0 %v527
      %529 = vmatprep.subr.mxu0 0.0
      %v530 = vand.u32 %v176, 4294901760
      %v531 = vsub.f32 %v176, %v530
      %532 = vmatpush1.msra.mxu0 %v531
      %533 = vmatprep.subr.mxu0 0.0
      %v534 = vand.u32 %v177, 4294901760
      %v535 = vsub.f32 %v177, %v534
      %536 = vmatpush1.msra.mxu0 %v535
      %537 = vmatprep.subr.mxu0 0.0
      %v538 = vand.u32 %v178, 4294901760
      %v539 = vsub.f32 %v178, %v538
      %540 = vmatpush1.msra.mxu0 %v539
      %541 = vmatprep.subr.mxu0 0.0
      %v542 = vand.u32 %v179, 4294901760
      %v543 = vsub.f32 %v179, %v542
      %544 = vmatpush1.msra.mxu0 %v543
      %545 = vmatprep.subr.mxu0 0.0
      %v546 = vand.u32 %v180, 4294901760
      %v547 = vsub.f32 %v180, %v546
      %548 = vmatpush1.msra.mxu0 %v547
      %549 = vmatprep.subr.mxu0 0.0
      %v550 = vand.u32 %v181, 4294901760
      %v551 = vsub.f32 %v181, %v550
      %552 = vmatpush1.msra.mxu0 %v551
      %553 = vmatprep.subr.mxu0 0.0
      %554 = vmatpush1.msra.mxu0 0.0
      %555 = vmatprep.subr.mxu0 0.0
      %556 = vmatpush1.msra.mxu0 0.0
      %557 = vmatprep.subr.mxu0 0.0
      %558 = vmatpush1.msra.mxu0 0.0
      %559 = vmatprep.subr.mxu0 0.0
      %560 = vmatpush1.msra.mxu0 0.0
      %561 = vmatprep.subr.mxu0 0.0
      %562 = vmatpush1.msra.mxu0 0.0
      %563 = vmatprep.subr.mxu0 0.0
      %564 = vmatpush1.msra.mxu0 0.0
      %565 = vmatprep.subr.mxu0 0.0
      %566 = vmatpush1.msra.mxu0 0.0
      %567 = vmatprep.subr.mxu0 0.0
      %568 = vmatpush1.msra.mxu0 0.0
      %569 = vmatprep.subr.mxu0 0.0
      %570 = vmatpush1.msra.mxu0 0.0
      %571 = vmatprep.subr.mxu0 0.0
      %572 = vmatpush1.msra.mxu0 0.0
      %573 = vmatprep.subr.mxu0 0.0
      %574 = vmatpush1.msra.mxu0 0.0
      %575 = vmatprep.subr.mxu0 0.0
      %576 = vmatpush1.msra.mxu0 0.0
      %577 = vmatprep.subr.mxu0 0.0
      %578 = vmatpush1.msra.mxu0 0.0
      %579 = vmatprep.subr.mxu0 0.0
      %580 = vmatpush1.msra.mxu0 0.0
      %581 = vmatprep.subr.mxu0 0.0
      %582 = vmatpush1.msra.mxu0 0.0
      %583 = vmatprep.subr.mxu0 0.0
      %584 = vmatpush1.msra.mxu0 0.0
      %585 = vmatprep.subr.mxu0 0.0
      %586 = vmatpush1.msra.mxu0 0.0
      %587 = vmatprep.subr.mxu0 0.0
      %588 = vmatpush1.msra.mxu0 0.0
      %589 = vmatprep.subr.mxu0 0.0
      %590 = vmatpush1.msra.mxu0 0.0
      %591 = vmatprep.subr.mxu0 0.0
      %592 = vmatpush1.msra.mxu0 0.0
      %593 = vmatprep.subr.mxu0 0.0
      %594 = vmatpush1.msra.mxu0 0.0
      %595 = vmatprep.subr.mxu0 0.0
      %596 = vmatpush1.msra.mxu0 0.0
      %597 = vmatprep.subr.mxu0 0.0
      %598 = vmatpush1.msra.mxu0 0.0
      %599 = vmatprep.subr.mxu0 0.0
      %600 = vmatpush1.msra.mxu0 0.0
      %601 = vmatprep.mubr.f32.mxu0 0.0
      %v602 = vand.u32 %v192, 4294901760
      %v603 = vsub.f32 %v192, %v602
      %604 = vmatmul.mubr.f32.gmra.mrb[0].mxu0 %v603
      %v605 = vpop.f32.mrb[0].mxu0
      %v606 = vadd.f32 %v476, %v605
      %v607 = vpop.f32.mrb[0].mxu0
      %608 = vmatprep.mubr.f32.mxu0 0.0
      %v609 = vand.u32 %v195, 4294901760
      %v610 = vsub.f32 %v195, %v609
      %611 = vmatmul.mubr.f32.gmra.mrb[0].mxu0 %v610
      %v612 = vpop.f32.mrb[0].mxu0
      %v613 = vadd.f32 %v482, %v612
      %v614 = vpop.f32.mrb[0].mxu0
      %615 = vmatprep.mubr.f32.mxu0 0.0
      %v616 = vand.u32 %v198, 4294901760
      %v617 = vsub.f32 %v198, %v616
      %618 = vmatmul.mubr.f32.gmra.mrb[0].mxu0 %v617
      %v619 = vpop.f32.mrb[0].mxu0
      %v620 = vadd.f32 %v488, %v619
      %v621 = vpop.f32.mrb[0].mxu0
      %622 = vmatprep.mubr.f32.mxu0 0.0
      %v623 = vand.u32 %v201, 4294901760
      %v624 = vsub.f32 %v201, %v623
      %625 = vmatmul.mubr.f32.gmra.mrb[0].mxu0 %v624
      %v626 = vpop.f32.mrb[0].mxu0
      %v627 = vadd.f32 %v494, %v626
      %v628 = vpop.f32.mrb[0].mxu0
      %629 = vmatprep.mubr.f32.mxu0 0.0
      %v630 = vand.u32 %v204, 4294901760
      %v631 = vsub.f32 %v204, %v630
      %632 = vmatmul.mubr.f32.gmra.mrb[0].mxu0 %v631
      %v633 = vpop.f32.mrb[0].mxu0
      %v634 = vadd.f32 %v500, %v633
      %v635 = vpop.f32.mrb[0].mxu0
      %636 = vmatprep.mubr.f32.mxu0 0.0
      %v637 = vand.u32 %v207, 4294901760
      %v638 = vsub.f32 %v207, %v637
      %639 = vmatmul.mubr.f32.gmra.mrb[0].mxu0 %v638
      %v640 = vpop.f32.mrb[0].mxu0
      %v641 = vadd.f32 %v506, %v640
      %v642 = vpop.f32.mrb[0].mxu0
      %643 = vmatprep.mubr.f32.mxu0 0.0
      %v644 = vand.u32 %v210, 4294901760
      %v645 = vsub.f32 %v210, %v644
      %646 = vmatmul.mubr.f32.gmra.mrb[0].mxu0 %v645
      %v647 = vpop.f32.mrb[0].mxu0
      %v648 = vadd.f32 %v512, %v647
      %v649 = vpop.f32.mrb[0].mxu0
      %650 = vmatprep.mubr.f32.mxu0 0.0
      %v651 = vand.u32 %v213, 4294901760
      %v652 = vsub.f32 %v213, %v651
      %653 = vmatmul.mubr.f32.gmra.mrb[0].mxu0 %v652
      %v654 = vpop.f32.mrb[0].mxu0
      %v655 = vadd.f32 %v518, %v654
      %v656 = vpop.f32.mrb[0].mxu0
      %657 = vdwg.mxu0
      %658 = vmatprep.subr.mxu0 0.0
      %v659 = vand.u32 %v174, 4294901760
      %660 = vmatpush1.msra.mxu0 %v659
      %661 = vmatprep.subr.mxu0 0.0
      %v662 = vand.u32 %v175, 4294901760
      %663 = vmatpush1.msra.mxu0 %v662
      %664 = vmatprep.subr.mxu0 0.0
      %v665 = vand.u32 %v176, 4294901760
      %666 = vmatpush1.msra.mxu0 %v665
      %667 = vmatprep.subr.mxu0 0.0
      %v668 = vand.u32 %v177, 4294901760
      %669 = vmatpush1.msra.mxu0 %v668
      %670 = vmatprep.subr.mxu0 0.0
      %v671 = vand.u32 %v178, 4294901760
      %672 = vmatpush1.msra.mxu0 %v671
      %673 = vmatprep.subr.mxu0 0.0
      %v674 = vand.u32 %v179, 4294901760
      %675 = vmatpush1.msra.mxu0 %v674
      %676 = vmatprep.subr.mxu0 0.0
      %v677 = vand.u32 %v180, 4294901760
      %678 = vmatpush1.msra.mxu0 %v677
      %679 = vmatprep.subr.mxu0 0.0
      %v680 = vand.u32 %v181, 4294901760
      %681 = vmatpush1.msra.mxu0 %v680
      %682 = vmatprep.subr.mxu0 0.0
      %683 = vmatpush1.msra.mxu0 0.0
      %684 = vmatprep.subr.mxu0 0.0
      %685 = vmatpush1.msra.mxu0 0.0
      %686 = vmatprep.subr.mxu0 0.0
      %687 = vmatpush1.msra.mxu0 0.0
      %688 = vmatprep.subr.mxu0 0.0
      %689 = vmatpush1.msra.mxu0 0.0
      %690 = vmatprep.subr.mxu0 0.0
      %691 = vmatpush1.msra.mxu0 0.0
      %692 = vmatprep.subr.mxu0 0.0
      %693 = vmatpush1.msra.mxu0 0.0
      %694 = vmatprep.subr.mxu0 0.0
      %695 = vmatpush1.msra.mxu0 0.0
      %696 = vmatprep.subr.mxu0 0.0
      %697 = vmatpush1.msra.mxu0 0.0
      %698 = vmatprep.subr.mxu0 0.0
      %699 = vmatpush1.msra.mxu0 0.0
      %700 = vmatprep.subr.mxu0 0.0
      %701 = vmatpush1.msra.mxu0 0.0
      %702 = vmatprep.subr.mxu0 0.0
      %703 = vmatpush1.msra.mxu0 0.0
      %704 = vmatprep.subr.mxu0 0.0
      %705 = vmatpush1.msra.mxu0 0.0
      %706 = vmatprep.subr.mxu0 0.0
      %707 = vmatpush1.msra.mxu0 0.0
      %708 = vmatprep.subr.mxu0 0.0
      %709 = vmatpush1.msra.mxu0 0.0
      %710 = vmatprep.subr.mxu0 0.0
      %711 = vmatpush1.msra.mxu0 0.0
      %712 = vmatprep.subr.mxu0 0.0
      %713 = vmatpush1.msra.mxu0 0.0
      %714 = vmatprep.subr.mxu0 0.0
      %715 = vmatpush1.msra.mxu0 0.0
      %716 = vmatprep.subr.mxu0 0.0
      %717 = vmatpush1.msra.mxu0 0.0
      %718 = vmatprep.subr.mxu0 0.0
      %719 = vmatpush1.msra.mxu0 0.0
      %720 = vmatprep.subr.mxu0 0.0
      %721 = vmatpush1.msra.mxu0 0.0
      %722 = vmatprep.subr.mxu0 0.0
      %723 = vmatpush1.msra.mxu0 0.0
      %724 = vmatprep.subr.mxu0 0.0
      %725 = vmatpush1.msra.mxu0 0.0
      %726 = vmatprep.subr.mxu0 0.0
      %727 = vmatpush1.msra.mxu0 0.0
      %728 = vmatprep.subr.mxu0 0.0
      %729 = vmatpush1.msra.mxu0 0.0
      %730 = vmatprep.mubr.f32.mxu0 0.0
      %v731 = vand.u32 %v192, 4294901760
      %v732 = vsub.f32 %v192, %v731
      %v733 = vand.u32 %v732, 4294901760
      %734 = vmatmul.mubr.f32.gmra.mrb[0].mxu0 %v733
      %v735 = vpop.f32.mrb[0].mxu0
      %v736 = vadd.f32 %v606, %v735
      %v737 = vpop.f32.mrb[0].mxu0
      %738 = vmatprep.mubr.f32.mxu0 0.0
      %v739 = vand.u32 %v195, 4294901760
      %v740 = vsub.f32 %v195, %v739
      %v741 = vand.u32 %v740, 4294901760
      %742 = vmatmul.mubr.f32.gmra.mrb[0].mxu0 %v741
      %v743 = vpop.f32.mrb[0].mxu0
      %v744 = vadd.f32 %v613, %v743
      %v745 = vpop.f32.mrb[0].mxu0
      %746 = vmatprep.mubr.f32.mxu0 0.0
      %v747 = vand.u32 %v198, 4294901760
      %v748 = vsub.f32 %v198, %v747
      %v749 = vand.u32 %v748, 4294901760
      %750 = vmatmul.mubr.f32.gmra.mrb[0].mxu0 %v749
      %v751 = vpop.f32.mrb[0].mxu0
      %v752 = vadd.f32 %v620, %v751
      %v753 = vpop.f32.mrb[0].mxu0
      %754 = vmatprep.mubr.f32.mxu0 0.0
      %v755 = vand.u32 %v201, 4294901760
      %v756 = vsub.f32 %v201, %v755
      %v757 = vand.u32 %v756, 4294901760
      %758 = vmatmul.mubr.f32.gmra.mrb[0].mxu0 %v757
      %v759 = vpop.f32.mrb[0].mxu0
      %v760 = vadd.f32 %v627, %v759
      %v761 = vpop.f32.mrb[0].mxu0
      %762 = vmatprep.mubr.f32.mxu0 0.0
      %v763 = vand.u32 %v204, 4294901760
      %v764 = vsub.f32 %v204, %v763
      %v765 = vand.u32 %v764, 4294901760
      %766 = vmatmul.mubr.f32.gmra.mrb[0].mxu0 %v765
      %v767 = vpop.f32.mrb[0].mxu0
      %v768 = vadd.f32 %v634, %v767
      %v769 = vpop.f32.mrb[0].mxu0
      %770 = vmatprep.mubr.f32.mxu0 0.0
      %v771 = vand.u32 %v207, 4294901760
      %v772 = vsub.f32 %v207, %v771
      %v773 = vand.u32 %v772, 4294901760
      %774 = vmatmul.mubr.f32.gmra.mrb[0].mxu0 %v773
      %v775 = vpop.f32.mrb[0].mxu0
      %v776 = vadd.f32 %v641, %v775
      %v777 = vpop.f32.mrb[0].mxu0
      %778 = vmatprep.mubr.f32.mxu0 0.0
      %v779 = vand.u32 %v210, 4294901760
      %v780 = vsub.f32 %v210, %v779
      %v781 = vand.u32 %v780, 4294901760
      %782 = vmatmul.mubr.f32.gmra.mrb[0].mxu0 %v781
      %v783 = vpop.f32.mrb[0].mxu0
      %v784 = vadd.f32 %v648, %v783
      %v785 = vpop.f32.mrb[0].mxu0
      %786 = vmatprep.mubr.f32.mxu0 0.0
      %v787 = vand.u32 %v213, 4294901760
      %v788 = vsub.f32 %v213, %v787
      %v789 = vand.u32 %v788, 4294901760
      %790 = vmatmul.mubr.f32.gmra.mrb[0].mxu0 %v789
      %v791 = vpop.f32.mrb[0].mxu0
      %v792 = vadd.f32 %v655, %v791
      %v793 = vpop.f32.mrb[0].mxu0
      %794 = vdwg.mxu0
      %795 = vmatprep.subr.mxu0 0.0
      %v796 = vand.u32 %v174, 4294901760
      %v797 = vsub.f32 %v174, %v796
      %v798 = vand.u32 %v797, 4294901760
      %799 = vmatpush1.msra.mxu0 %v798
      %800 = vmatprep.subr.mxu0 0.0
      %v801 = vand.u32 %v175, 4294901760
      %v802 = vsub.f32 %v175, %v801
      %v803 = vand.u32 %v802, 4294901760
      %804 = vmatpush1.msra.mxu0 %v803
      %805 = vmatprep.subr.mxu0 0.0
      %v806 = vand.u32 %v176, 4294901760
      %v807 = vsub.f32 %v176, %v806
      %v808 = vand.u32 %v807, 4294901760
      %809 = vmatpush1.msra.mxu0 %v808
      %810 = vmatprep.subr.mxu0 0.0
      %v811 = vand.u32 %v177, 4294901760
      %v812 = vsub.f32 %v177, %v811
      %v813 = vand.u32 %v812, 4294901760
      %814 = vmatpush1.msra.mxu0 %v813
      %815 = vmatprep.subr.mxu0 0.0
      %v816 = vand.u32 %v178, 4294901760
      %v817 = vsub.f32 %v178, %v816
      %v818 = vand.u32 %v817, 4294901760
      %819 = vmatpush1.msra.mxu0 %v818
      %820 = vmatprep.subr.mxu0 0.0
      %v821 = vand.u32 %v179, 4294901760
      %v822 = vsub.f32 %v179, %v821
      %v823 = vand.u32 %v822, 4294901760
      %824 = vmatpush1.msra.mxu0 %v823
      %825 = vmatprep.subr.mxu0 0.0
      %v826 = vand.u32 %v180, 4294901760
      %v827 = vsub.f32 %v180, %v826
      %v828 = vand.u32 %v827, 4294901760
      %829 = vmatpush1.msra.mxu0 %v828
      %830 = vmatprep.subr.mxu0 0.0
      %v831 = vand.u32 %v181, 4294901760
      %v832 = vsub.f32 %v181, %v831
      %v833 = vand.u32 %v832, 4294901760
      %834 = vmatpush1.msra.mxu0 %v833
      %835 = vmatprep.subr.mxu0 0.0
      %836 = vmatpush1.msra.mxu0 0.0
      %837 = vmatprep.subr.mxu0 0.0
      %838 = vmatpush1.msra.mxu0 0.0
      %839 = vmatprep.subr.mxu0 0.0
      %840 = vmatpush1.msra.mxu0 0.0
      %841 = vmatprep.subr.mxu0 0.0
      %842 = vmatpush1.msra.mxu0 0.0
      %843 = vmatprep.subr.mxu0 0.0
      %844 = vmatpush1.msra.mxu0 0.0
      %845 = vmatprep.subr.mxu0 0.0
      %846 = vmatpush1.msra.mxu0 0.0
      %847 = vmatprep.subr.mxu0 0.0
      %848 = vmatpush1.msra.mxu0 0.0
      %849 = vmatprep.subr.mxu0 0.0
      %850 = vmatpush1.msra.mxu0 0.0
      %851 = vmatprep.subr.mxu0 0.0
      %852 = vmatpush1.msra.mxu0 0.0
      %853 = vmatprep.subr.mxu0 0.0
      %854 = vmatpush1.msra.mxu0 0.0
      %855 = vmatprep.subr.mxu0 0.0
      %856 = vmatpush1.msra.mxu0 0.0
      %857 = vmatprep.subr.mxu0 0.0
      %858 = vmatpush1.msra.mxu0 0.0
      %859 = vmatprep.subr.mxu0 0.0
      %860 = vmatpush1.msra.mxu0 0.0
      %861 = vmatprep.subr.mxu0 0.0
      %862 = vmatpush1.msra.mxu0 0.0
      %863 = vmatprep.subr.mxu0 0.0
      %864 = vmatpush1.msra.mxu0 0.0
      %865 = vmatprep.subr.mxu0 0.0
      %866 = vmatpush1.msra.mxu0 0.0
      %867 = vmatprep.subr.mxu0 0.0
      %868 = vmatpush1.msra.mxu0 0.0
      %869 = vmatprep.subr.mxu0 0.0
      %870 = vmatpush1.msra.mxu0 0.0
      %871 = vmatprep.subr.mxu0 0.0
      %872 = vmatpush1.msra.mxu0 0.0
      %873 = vmatprep.subr.mxu0 0.0
      %874 = vmatpush1.msra.mxu0 0.0
      %875 = vmatprep.subr.mxu0 0.0
      %876 = vmatpush1.msra.mxu0 0.0
      %877 = vmatprep.subr.mxu0 0.0
      %878 = vmatpush1.msra.mxu0 0.0
      %879 = vmatprep.subr.mxu0 0.0
      %880 = vmatpush1.msra.mxu0 0.0
      %881 = vmatprep.subr.mxu0 0.0
      %882 = vmatpush1.msra.mxu0 0.0
      %883 = vmatprep.mubr.f32.mxu0 0.0
      %v884 = vand.u32 %v192, 4294901760
      %885 = vmatmul.mubr.f32.gmra.mrb[0].mxu0 %v884
      %v886 = vpop.f32.mrb[0].mxu0
      %v887 = vadd.f32 %v736, %v886
      %v888 = vpop.f32.mrb[0].mxu0
      %889 = vmatprep.mubr.f32.mxu0 0.0
      %v890 = vand.u32 %v195, 4294901760
      %891 = vmatmul.mubr.f32.gmra.mrb[0].mxu0 %v890
      %v892 = vpop.f32.mrb[0].mxu0
      %v893 = vadd.f32 %v744, %v892
      %v894 = vpop.f32.mrb[0].mxu0
      %895 = vmatprep.mubr.f32.mxu0 0.0
      %v896 = vand.u32 %v198, 4294901760
      %897 = vmatmul.mubr.f32.gmra.mrb[0].mxu0 %v896
      %v898 = vpop.f32.mrb[0].mxu0
      %v899 = vadd.f32 %v752, %v898
      %v900 = vpop.f32.mrb[0].mxu0
      %901 = vmatprep.mubr.f32.mxu0 0.0
      %v902 = vand.u32 %v201, 4294901760
      %903 = vmatmul.mubr.f32.gmra.mrb[0].mxu0 %v902
      %v904 = vpop.f32.mrb[0].mxu0
      %v905 = vadd.f32 %v760, %v904
      %v906 = vpop.f32.mrb[0].mxu0
      %907 = vmatprep.mubr.f32.mxu0 0.0
      %v908 = vand.u32 %v204, 4294901760
      %909 = vmatmul.mubr.f32.gmra.mrb[0].mxu0 %v908
      %v910 = vpop.f32.mrb[0].mxu0
      %v911 = vadd.f32 %v768, %v910
      %v912 = vpop.f32.mrb[0].mxu0
      %913 = vmatprep.mubr.f32.mxu0 0.0
      %v914 = vand.u32 %v207, 4294901760
      %915 = vmatmul.mubr.f32.gmra.mrb[0].mxu0 %v914
      %v916 = vpop.f32.mrb[0].mxu0
      %v917 = vadd.f32 %v776, %v916
      %v918 = vpop.f32.mrb[0].mxu0
      %919 = vmatprep.mubr.f32.mxu0 0.0
      %v920 = vand.u32 %v210, 4294901760
      %921 = vmatmul.mubr.f32.gmra.mrb[0].mxu0 %v920
      %v922 = vpop.f32.mrb[0].mxu0
      %v923 = vadd.f32 %v784, %v922
      %v924 = vpop.f32.mrb[0].mxu0
      %925 = vmatprep.mubr.f32.mxu0 0.0
      %v926 = vand.u32 %v213, 4294901760
      %927 = vmatmul.mubr.f32.gmra.mrb[0].mxu0 %v926
      %v928 = vpop.f32.mrb[0].mxu0
      %v929 = vadd.f32 %v792, %v928
      %v930 = vpop.f32.mrb[0].mxu0
      %931 = vdwg.mxu0
      %932 = vmatprep.subr.mxu0 0.0
      %v933 = vand.u32 %v174, 4294901760
      %934 = vmatpush1.msra.mxu0 %v933
      %935 = vmatprep.subr.mxu0 0.0
      %v936 = vand.u32 %v175, 4294901760
      %937 = vmatpush1.msra.mxu0 %v936
      %938 = vmatprep.subr.mxu0 0.0
      %v939 = vand.u32 %v176, 4294901760
      %940 = vmatpush1.msra.mxu0 %v939
      %941 = vmatprep.subr.mxu0 0.0
      %v942 = vand.u32 %v177, 4294901760
      %943 = vmatpush1.msra.mxu0 %v942
      %944 = vmatprep.subr.mxu0 0.0
      %v945 = vand.u32 %v178, 4294901760
      %946 = vmatpush1.msra.mxu0 %v945
      %947 = vmatprep.subr.mxu0 0.0
      %v948 = vand.u32 %v179, 4294901760
      %949 = vmatpush1.msra.mxu0 %v948
      %950 = vmatprep.subr.mxu0 0.0
      %v951 = vand.u32 %v180, 4294901760
      %952 = vmatpush1.msra.mxu0 %v951
      %953 = vmatprep.subr.mxu0 0.0
      %v954 = vand.u32 %v181, 4294901760
      %955 = vmatpush1.msra.mxu0 %v954
      %956 = vmatprep.subr.mxu0 0.0
      %957 = vmatpush1.msra.mxu0 0.0
      %958 = vmatprep.subr.mxu0 0.0
      %959 = vmatpush1.msra.mxu0 0.0
      %960 = vmatprep.subr.mxu0 0.0
      %961 = vmatpush1.msra.mxu0 0.0
      %962 = vmatprep.subr.mxu0 0.0
      %963 = vmatpush1.msra.mxu0 0.0
      %964 = vmatprep.subr.mxu0 0.0
      %965 = vmatpush1.msra.mxu0 0.0
      %966 = vmatprep.subr.mxu0 0.0
      %967 = vmatpush1.msra.mxu0 0.0
      %968 = vmatprep.subr.mxu0 0.0
      %969 = vmatpush1.msra.mxu0 0.0
      %970 = vmatprep.subr.mxu0 0.0
      %971 = vmatpush1.msra.mxu0 0.0
      %972 = vmatprep.subr.mxu0 0.0
      %973 = vmatpush1.msra.mxu0 0.0
      %974 = vmatprep.subr.mxu0 0.0
      %975 = vmatpush1.msra.mxu0 0.0
      %976 = vmatprep.subr.mxu0 0.0
      %977 = vmatpush1.msra.mxu0 0.0
      %978 = vmatprep.subr.mxu0 0.0
      %979 = vmatpush1.msra.mxu0 0.0
      %980 = vmatprep.subr.mxu0 0.0
      %981 = vmatpush1.msra.mxu0 0.0
      %982 = vmatprep.subr.mxu0 0.0
      %983 = vmatpush1.msra.mxu0 0.0
      %984 = vmatprep.subr.mxu0 0.0
      %985 = vmatpush1.msra.mxu0 0.0
      %986 = vmatprep.subr.mxu0 0.0
      %987 = vmatpush1.msra.mxu0 0.0
      %988 = vmatprep.subr.mxu0 0.0
      %989 = vmatpush1.msra.mxu0 0.0
      %990 = vmatprep.subr.mxu0 0.0
      %991 = vmatpush1.msra.mxu0 0.0
      %992 = vmatprep.subr.mxu0 0.0
      %993 = vmatpush1.msra.mxu0 0.0
      %994 = vmatprep.subr.mxu0 0.0
      %995 = vmatpush1.msra.mxu0 0.0
      %996 = vmatprep.subr.mxu0 0.0
      %997 = vmatpush1.msra.mxu0 0.0
      %998 = vmatprep.subr.mxu0 0.0
      %999 = vmatpush1.msra.mxu0 0.0
      %1000 = vmatprep.subr.mxu0 0.0
      %1001 = vmatpush1.msra.mxu0 0.0
      %1002 = vmatprep.subr.mxu0 0.0
      %1003 = vmatpush1.msra.mxu0 0.0
      %1004 = vmatprep.mubr.f32.mxu0 0.0
      %v1005 = vand.u32 %v192, 4294901760
      %1006 = vmatmul.mubr.f32.gmra.mrb[0].mxu0 %v1005
      %v1007 = vpop.f32.mrb[0].mxu0
      %v1008 = vadd.f32 %v887, %v1007
      %v1009 = vpop.f32.mrb[0].mxu0
      %1010 = vmatprep.mubr.f32.mxu0 0.0
      %v1011 = vand.u32 %v195, 4294901760
      %1012 = vmatmul.mubr.f32.gmra.mrb[0].mxu0 %v1011
      %v1013 = vpop.f32.mrb[0].mxu0
      %v1014 = vadd.f32 %v893, %v1013
      %v1015 = vpop.f32.mrb[0].mxu0
      %1016 = vmatprep.mubr.f32.mxu0 0.0
      %v1017 = vand.u32 %v198, 4294901760
      %1018 = vmatmul.mubr.f32.gmra.mrb[0].mxu0 %v1017
      %v1019 = vpop.f32.mrb[0].mxu0
      %v1020 = vadd.f32 %v899, %v1019
      %v1021 = vpop.f32.mrb[0].mxu0
      %1022 = vmatprep.mubr.f32.mxu0 0.0
      %v1023 = vand.u32 %v201, 4294901760
      %1024 = vmatmul.mubr.f32.gmra.mrb[0].mxu0 %v1023
      %v1025 = vpop.f32.mrb[0].mxu0
      %v1026 = vadd.f32 %v905, %v1025
      %v1027 = vpop.f32.mrb[0].mxu0
      %1028 = vmatprep.mubr.f32.mxu0 0.0
      %v1029 = vand.u32 %v204, 4294901760
      %1030 = vmatmul.mubr.f32.gmra.mrb[0].mxu0 %v1029
      %v1031 = vpop.f32.mrb[0].mxu0
      %v1032 = vadd.f32 %v911, %v1031
      %v1033 = vpop.f32.mrb[0].mxu0
      %1034 = vmatprep.mubr.f32.mxu0 0.0
      %v1035 = vand.u32 %v207, 4294901760
      %1036 = vmatmul.mubr.f32.gmra.mrb[0].mxu0 %v1035
      %v1037 = vpop.f32.mrb[0].mxu0
      %v1038 = vadd.f32 %v917, %v1037
      %v1039 = vpop.f32.mrb[0].mxu0
      %1040 = vmatprep.mubr.f32.mxu0 0.0
      %v1041 = vand.u32 %v210, 4294901760
      %1042 = vmatmul.mubr.f32.gmra.mrb[0].mxu0 %v1041
      %v1043 = vpop.f32.mrb[0].mxu0
      %v1044 = vadd.f32 %v923, %v1043
      %v1045 = vpop.f32.mrb[0].mxu0
      %1046 = vmatprep.mubr.f32.mxu0 0.0
      %v1047 = vand.u32 %v213, 4294901760
      %1048 = vmatmul.mubr.f32.gmra.mrb[0].mxu0 %v1047
      %v1049 = vpop.f32.mrb[0].mxu0
      %v1050 = vadd.f32 %v929, %v1049
      %v1051 = vpop.f32.mrb[0].mxu0
      %1052 = vdwg.mxu0
      %v1053 = vld [vmem:[%s2] sm:$0xff]
      %v1054 = vld [vmem:[%s2 + $0x8] sm:$0xff]
      %vm1055 = vcmask 130048
      %v1057 = vsel %vm1055, %v1008, 0
      %v1060 = vsel %vm1055, %v1014, 0
      %v1063 = vsel %vm1055, %v1020, 0
      %v1066 = vsel %vm1055, %v1026, 0
      %v1069 = vsel %vm1055, %v1032, 0
      %v1072 = vsel %vm1055, %v1038, 0
      %v1075 = vsel %vm1055, %v1044, 0
      %v1078 = vsel %vm1055, %v1050, 0
      %1080 = vmatprep.subr.mxu0 0.0
      %v1081 = vand.u32 %v1053, 4294901760
      %1082 = vmatpush1.msra.mxu0 %v1081
      %1083 = vmatprep.subr.mxu0 0.0
      %v1084 = vand.u32 %v1054, 4294901760
      %1085 = vmatpush1.msra.mxu0 %v1084
      %1086 = vmatprep.subr.mxu0 0.0
      %1087 = vmatpush1.msra.mxu0 0.0
      %1088 = vmatprep.subr.mxu0 0.0
      %1089 = vmatpush1.msra.mxu0 0.0
      %1090 = vmatprep.subr.mxu0 0.0
      %1091 = vmatpush1.msra.mxu0 0.0
      %1092 = vmatprep.subr.mxu0 0.0
      %1093 = vmatpush1.msra.mxu0 0.0
      %1094 = vmatprep.subr.mxu0 0.0
      %1095 = vmatpush1.msra.mxu0 0.0
      %1096 = vmatprep.subr.mxu0 0.0
      %1097 = vmatpush1.msra.mxu0 0.0
      %1098 = vmatprep.subr.mxu0 0.0
      %1099 = vmatpush1.msra.mxu0 0.0
      %1100 = vmatprep.subr.mxu0 0.0
      %1101 = vmatpush1.msra.mxu0 0.0
      %1102 = vmatprep.subr.mxu0 0.0
      %1103 = vmatpush1.msra.mxu0 0.0
      %1104 = vmatprep.subr.mxu0 0.0
      %1105 = vmatpush1.msra.mxu0 0.0
      %1106 = vmatprep.subr.mxu0 0.0
      %1107 = vmatpush1.msra.mxu0 0.0
      %1108 = vmatprep.subr.mxu0 0.0
      %1109 = vmatpush1.msra.mxu0 0.0
      %1110 = vmatprep.subr.mxu0 0.0
      %1111 = vmatpush1.msra.mxu0 0.0
      %1112 = vmatprep.subr.mxu0 0.0
      %1113 = vmatpush1.msra.mxu0 0.0
      %1114 = vmatprep.subr.mxu0 0.0
      %1115 = vmatpush1.msra.mxu0 0.0
      %1116 = vmatprep.subr.mxu0 0.0
      %1117 = vmatpush1.msra.mxu0 0.0
      %1118 = vmatprep.subr.mxu0 0.0
      %1119 = vmatpush1.msra.mxu0 0.0
      %1120 = vmatprep.subr.mxu0 0.0
      %1121 = vmatpush1.msra.mxu0 0.0
      %1122 = vmatprep.subr.mxu0 0.0
      %1123 = vmatpush1.msra.mxu0 0.0
      %1124 = vmatprep.subr.mxu0 0.0
      %1125 = vmatpush1.msra.mxu0 0.0
      %1126 = vmatprep.subr.mxu0 0.0
      %1127 = vmatpush1.msra.mxu0 0.0
      %1128 = vmatprep.subr.mxu0 0.0
      %1129 = vmatpush1.msra.mxu0 0.0
      %1130 = vmatprep.subr.mxu0 0.0
      %1131 = vmatpush1.msra.mxu0 0.0
      %1132 = vmatprep.subr.mxu0 0.0
      %1133 = vmatpush1.msra.mxu0 0.0
      %1134 = vmatprep.subr.mxu0 0.0
      %1135 = vmatpush1.msra.mxu0 0.0
      %1136 = vmatprep.subr.mxu0 0.0
      %1137 = vmatpush1.msra.mxu0 0.0
      %1138 = vmatprep.subr.mxu0 0.0
      %1139 = vmatpush1.msra.mxu0 0.0
      %1140 = vmatprep.subr.mxu0 0.0
      %1141 = vmatpush1.msra.mxu0 0.0
      %1142 = vmatprep.subr.mxu0 0.0
      %1143 = vmatpush1.msra.mxu0 0.0
      %1144 = vmatprep.subr.mxu0 0.0
      %1145 = vmatpush1.msra.mxu0 0.0
      %1146 = vmatprep.mubr.f32.mxu0 0.0
      %v1147 = vand.u32 %v1057, 4294901760
      %v1148 = vsub.f32 %v1057, %v1147
      %v1149 = vand.u32 %v1148, 4294901760
      %v1150 = vsub.f32 %v1148, %v1149
      %v1151 = vand.u32 %v1150, 4294901760
      %1152 = vmatmul.mubr.f32.gmra.mrb[0].mxu0 %v1151
      %v1153 = vpop.f32.mrb[0].mxu0
      %v1154 = vadd.f32 0.0, %v1153
      %v1155 = vpop.f32.mrb[0].mxu0
      %1156 = vmatprep.mubr.f32.mxu0 0.0
      %v1157 = vand.u32 %v1060, 4294901760
      %v1158 = vsub.f32 %v1060, %v1157
      %v1159 = vand.u32 %v1158, 4294901760
      %v1160 = vsub.f32 %v1158, %v1159
      %v1161 = vand.u32 %v1160, 4294901760
      %1162 = vmatmul.mubr.f32.gmra.mrb[0].mxu0 %v1161
      %v1163 = vpop.f32.mrb[0].mxu0
      %v1164 = vadd.f32 0.0, %v1163
      %v1165 = vpop.f32.mrb[0].mxu0
      %1166 = vmatprep.mubr.f32.mxu0 0.0
      %v1167 = vand.u32 %v1063, 4294901760
      %v1168 = vsub.f32 %v1063, %v1167
      %v1169 = vand.u32 %v1168, 4294901760
      %v1170 = vsub.f32 %v1168, %v1169
      %v1171 = vand.u32 %v1170, 4294901760
      %1172 = vmatmul.mubr.f32.gmra.mrb[0].mxu0 %v1171
      %v1173 = vpop.f32.mrb[0].mxu0
      %v1174 = vadd.f32 0.0, %v1173
      %v1175 = vpop.f32.mrb[0].mxu0
      %1176 = vmatprep.mubr.f32.mxu0 0.0
      %v1177 = vand.u32 %v1066, 4294901760
      %v1178 = vsub.f32 %v1066, %v1177
      %v1179 = vand.u32 %v1178, 4294901760
      %v1180 = vsub.f32 %v1178, %v1179
      %v1181 = vand.u32 %v1180, 4294901760
      %1182 = vmatmul.mubr.f32.gmra.mrb[0].mxu0 %v1181
      %v1183 = vpop.f32.mrb[0].mxu0
      %v1184 = vadd.f32 0.0, %v1183
      %v1185 = vpop.f32.mrb[0].mxu0
      %1186 = vmatprep.mubr.f32.mxu0 0.0
      %v1187 = vand.u32 %v1069, 4294901760
      %v1188 = vsub.f32 %v1069, %v1187
      %v1189 = vand.u32 %v1188, 4294901760
      %v1190 = vsub.f32 %v1188, %v1189
      %v1191 = vand.u32 %v1190, 4294901760
      %1192 = vmatmul.mubr.f32.gmra.mrb[0].mxu0 %v1191
      %v1193 = vpop.f32.mrb[0].mxu0
      %v1194 = vadd.f32 0.0, %v1193
      %v1195 = vpop.f32.mrb[0].mxu0
      %1196 = vmatprep.mubr.f32.mxu0 0.0
      %v1197 = vand.u32 %v1072, 4294901760
      %v1198 = vsub.f32 %v1072, %v1197
      %v1199 = vand.u32 %v1198, 4294901760
      %v1200 = vsub.f32 %v1198, %v1199
      %v1201 = vand.u32 %v1200, 4294901760
      %1202 = vmatmul.mubr.f32.gmra.mrb[0].mxu0 %v1201
      %v1203 = vpop.f32.mrb[0].mxu0
      %v1204 = vadd.f32 0.0, %v1203
      %v1205 = vpop.f32.mrb[0].mxu0
      %1206 = vmatprep.mubr.f32.mxu0 0.0
      %v1207 = vand.u32 %v1075, 4294901760
      %v1208 = vsub.f32 %v1075, %v1207
      %v1209 = vand.u32 %v1208, 4294901760
      %v1210 = vsub.f32 %v1208, %v1209
      %v1211 = vand.u32 %v1210, 4294901760
      %1212 = vmatmul.mubr.f32.gmra.mrb[0].mxu0 %v1211
      %v1213 = vpop.f32.mrb[0].mxu0
      %v1214 = vadd.f32 0.0, %v1213
      %v1215 = vpop.f32.mrb[0].mxu0
      %1216 = vmatprep.mubr.f32.mxu0 0.0
      %v1217 = vand.u32 %v1078, 4294901760
      %v1218 = vsub.f32 %v1078, %v1217
      %v1219 = vand.u32 %v1218, 4294901760
      %v1220 = vsub.f32 %v1218, %v1219
      %v1221 = vand.u32 %v1220, 4294901760
      %1222 = vmatmul.mubr.f32.gmra.mrb[0].mxu0 %v1221
      %v1223 = vpop.f32.mrb[0].mxu0
      %v1224 = vadd.f32 0.0, %v1223
      %v1225 = vpop.f32.mrb[0].mxu0
      %1226 = vdwg.mxu0
      %1227 = vmatprep.subr.mxu0 0.0
      %v1228 = vand.u32 %v1053, 4294901760
      %v1229 = vsub.f32 %v1053, %v1228
      %v1230 = vand.u32 %v1229, 4294901760
      %v1231 = vsub.f32 %v1229, %v1230
      %v1232 = vand.u32 %v1231, 4294901760
      %1233 = vmatpush1.msra.mxu0 %v1232
      %1234 = vmatprep.subr.mxu0 0.0
      %v1235 = vand.u32 %v1054, 4294901760
      %v1236 = vsub.f32 %v1054, %v1235
      %v1237 = vand.u32 %v1236, 4294901760
      %v1238 = vsub.f32 %v1236, %v1237
      %v1239 = vand.u32 %v1238, 4294901760
      %1240 = vmatpush1.msra.mxu0 %v1239
      %1241 = vmatprep.subr.mxu0 0.0
      %1242 = vmatpush1.msra.mxu0 0.0
      %1243 = vmatprep.subr.mxu0 0.0
      %1244 = vmatpush1.msra.mxu0 0.0
      %1245 = vmatprep.subr.mxu0 0.0
      %1246 = vmatpush1.msra.mxu0 0.0
      %1247 = vmatprep.subr.mxu0 0.0
      %1248 = vmatpush1.msra.mxu0 0.0
      %1249 = vmatprep.subr.mxu0 0.0
      %1250 = vmatpush1.msra.mxu0 0.0
      %1251 = vmatprep.subr.mxu0 0.0
      %1252 = vmatpush1.msra.mxu0 0.0
      %1253 = vmatprep.subr.mxu0 0.0
      %1254 = vmatpush1.msra.mxu0 0.0
      %1255 = vmatprep.subr.mxu0 0.0
      %1256 = vmatpush1.msra.mxu0 0.0
      %1257 = vmatprep.subr.mxu0 0.0
      %1258 = vmatpush1.msra.mxu0 0.0
      %1259 = vmatprep.subr.mxu0 0.0
      %1260 = vmatpush1.msra.mxu0 0.0
      %1261 = vmatprep.subr.mxu0 0.0
      %1262 = vmatpush1.msra.mxu0 0.0
      %1263 = vmatprep.subr.mxu0 0.0
      %1264 = vmatpush1.msra.mxu0 0.0
      %1265 = vmatprep.subr.mxu0 0.0
      %1266 = vmatpush1.msra.mxu0 0.0
      %1267 = vmatprep.subr.mxu0 0.0
      %1268 = vmatpush1.msra.mxu0 0.0
      %1269 = vmatprep.subr.mxu0 0.0
      %1270 = vmatpush1.msra.mxu0 0.0
      %1271 = vmatprep.subr.mxu0 0.0
      %1272 = vmatpush1.msra.mxu0 0.0
      %1273 = vmatprep.subr.mxu0 0.0
      %1274 = vmatpush1.msra.mxu0 0.0
      %1275 = vmatprep.subr.mxu0 0.0
      %1276 = vmatpush1.msra.mxu0 0.0
      %1277 = vmatprep.subr.mxu0 0.0
      %1278 = vmatpush1.msra.mxu0 0.0
      %1279 = vmatprep.subr.mxu0 0.0
      %1280 = vmatpush1.msra.mxu0 0.0
      %1281 = vmatprep.subr.mxu0 0.0
      %1282 = vmatpush1.msra.mxu0 0.0
      %1283 = vmatprep.subr.mxu0 0.0
      %1284 = vmatpush1.msra.mxu0 0.0
      %1285 = vmatprep.subr.mxu0 0.0
      %1286 = vmatpush1.msra.mxu0 0.0
      %1287 = vmatprep.subr.mxu0 0.0
      %1288 = vmatpush1.msra.mxu0 0.0
      %1289 = vmatprep.subr.mxu0 0.0
      %1290 = vmatpush1.msra.mxu0 0.0
      %1291 = vmatprep.subr.mxu0 0.0
      %1292 = vmatpush1.msra.mxu0 0.0
      %1293 = vmatprep.subr.mxu0 0.0
      %1294 = vmatpush1.msra.mxu0 0.0
      %1295 = vmatprep.subr.mxu0 0.0
      %1296 = vmatpush1.msra.mxu0 0.0
      %1297 = vmatprep.subr.mxu0 0.0
      %1298 = vmatpush1.msra.mxu0 0.0
      %1299 = vmatprep.subr.mxu0 0.0
      %1300 = vmatpush1.msra.mxu0 0.0
      %1301 = vmatprep.mubr.f32.mxu0 0.0
      %v1302 = vand.u32 %v1057, 4294901760
      %1303 = vmatmul.mubr.f32.gmra.mrb[0].mxu0 %v1302
      %v1304 = vpop.f32.mrb[0].mxu0
      %v1305 = vadd.f32 %v1154, %v1304
      %v1306 = vpop.f32.mrb[0].mxu0
      %1307 = vmatprep.mubr.f32.mxu0 0.0
      %v1308 = vand.u32 %v1060, 4294901760
      %1309 = vmatmul.mubr.f32.gmra.mrb[0].mxu0 %v1308
      %v1310 = vpop.f32.mrb[0].mxu0
      %v1311 = vadd.f32 %v1164, %v1310
      %v1312 = vpop.f32.mrb[0].mxu0
      %1313 = vmatprep.mubr.f32.mxu0 0.0
      %v1314 = vand.u32 %v1063, 4294901760
      %1315 = vmatmul.mubr.f32.gmra.mrb[0].mxu0 %v1314
      %v1316 = vpop.f32.mrb[0].mxu0
      %v1317 = vadd.f32 %v1174, %v1316
      %v1318 = vpop.f32.mrb[0].mxu0
      %1319 = vmatprep.mubr.f32.mxu0 0.0
      %v1320 = vand.u32 %v1066, 4294901760
      %1321 = vmatmul.mubr.f32.gmra.mrb[0].mxu0 %v1320
      %v1322 = vpop.f32.mrb[0].mxu0
      %v1323 = vadd.f32 %v1184, %v1322
      %v1324 = vpop.f32.mrb[0].mxu0
      %1325 = vmatprep.mubr.f32.mxu0 0.0
      %v1326 = vand.u32 %v1069, 4294901760
      %1327 = vmatmul.mubr.f32.gmra.mrb[0].mxu0 %v1326
      %v1328 = vpop.f32.mrb[0].mxu0
      %v1329 = vadd.f32 %v1194, %v1328
      %v1330 = vpop.f32.mrb[0].mxu0
      %1331 = vmatprep.mubr.f32.mxu0 0.0
      %v1332 = vand.u32 %v1072, 4294901760
      %1333 = vmatmul.mubr.f32.gmra.mrb[0].mxu0 %v1332
      %v1334 = vpop.f32.mrb[0].mxu0
      %v1335 = vadd.f32 %v1204, %v1334
      %v1336 = vpop.f32.mrb[0].mxu0
      %1337 = vmatprep.mubr.f32.mxu0 0.0
      %v1338 = vand.u32 %v1075, 4294901760
      %1339 = vmatmul.mubr.f32.gmra.mrb[0].mxu0 %v1338
      %v1340 = vpop.f32.mrb[0].mxu0
      %v1341 = vadd.f32 %v1214, %v1340
      %v1342 = vpop.f32.mrb[0].mxu0
      %1343 = vmatprep.mubr.f32.mxu0 0.0
      %v1344 = vand.u32 %v1078, 4294901760
      %1345 = vmatmul.mubr.f32.gmra.mrb[0].mxu0 %v1344
      %v1346 = vpop.f32.mrb[0].mxu0
      %v1347 = vadd.f32 %v1224, %v1346
      %v1348 = vpop.f32.mrb[0].mxu0
      %1349 = vdwg.mxu0
      %1350 = vmatprep.subr.mxu0 0.0
      %v1351 = vand.u32 %v1053, 4294901760
      %v1352 = vsub.f32 %v1053, %v1351
      %1353 = vmatpush1.msra.mxu0 %v1352
      %1354 = vmatprep.subr.mxu0 0.0
      %v1355 = vand.u32 %v1054, 4294901760
      %v1356 = vsub.f32 %v1054, %v1355
      %1357 = vmatpush1.msra.mxu0 %v1356
      %1358 = vmatprep.subr.mxu0 0.0
      %1359 = vmatpush1.msra.mxu0 0.0
      %1360 = vmatprep.subr.mxu0 0.0
      %1361 = vmatpush1.msra.mxu0 0.0
      %1362 = vmatprep.subr.mxu0 0.0
      %1363 = vmatpush1.msra.mxu0 0.0
      %1364 = vmatprep.subr.mxu0 0.0
      %1365 = vmatpush1.msra.mxu0 0.0
      %1366 = vmatprep.subr.mxu0 0.0
      %1367 = vmatpush1.msra.mxu0 0.0
      %1368 = vmatprep.subr.mxu0 0.0
      %1369 = vmatpush1.msra.mxu0 0.0
      %1370 = vmatprep.subr.mxu0 0.0
      %1371 = vmatpush1.msra.mxu0 0.0
      %1372 = vmatprep.subr.mxu0 0.0
      %1373 = vmatpush1.msra.mxu0 0.0
      %1374 = vmatprep.subr.mxu0 0.0
      %1375 = vmatpush1.msra.mxu0 0.0
      %1376 = vmatprep.subr.mxu0 0.0
      %1377 = vmatpush1.msra.mxu0 0.0
      %1378 = vmatprep.subr.mxu0 0.0
      %1379 = vmatpush1.msra.mxu0 0.0
      %1380 = vmatprep.subr.mxu0 0.0
      %1381 = vmatpush1.msra.mxu0 0.0
      %1382 = vmatprep.subr.mxu0 0.0
      %1383 = vmatpush1.msra.mxu0 0.0
      %1384 = vmatprep.subr.mxu0 0.0
      %1385 = vmatpush1.msra.mxu0 0.0
      %1386 = vmatprep.subr.mxu0 0.0
      %1387 = vmatpush1.msra.mxu0 0.0
      %1388 = vmatprep.subr.mxu0 0.0
      %1389 = vmatpush1.msra.mxu0 0.0
      %1390 = vmatprep.subr.mxu0 0.0
      %1391 = vmatpush1.msra.mxu0 0.0
      %1392 = vmatprep.subr.mxu0 0.0
      %1393 = vmatpush1.msra.mxu0 0.0
      %1394 = vmatprep.subr.mxu0 0.0
      %1395 = vmatpush1.msra.mxu0 0.0
      %1396 = vmatprep.subr.mxu0 0.0
      %1397 = vmatpush1.msra.mxu0 0.0
      %1398 = vmatprep.subr.mxu0 0.0
      %1399 = vmatpush1.msra.mxu0 0.0
      %1400 = vmatprep.subr.mxu0 0.0
      %1401 = vmatpush1.msra.mxu0 0.0
      %1402 = vmatprep.subr.mxu0 0.0
      %1403 = vmatpush1.msra.mxu0 0.0
      %1404 = vmatprep.subr.mxu0 0.0
      %1405 = vmatpush1.msra.mxu0 0.0
      %1406 = vmatprep.subr.mxu0 0.0
      %1407 = vmatpush1.msra.mxu0 0.0
      %1408 = vmatprep.subr.mxu0 0.0
      %1409 = vmatpush1.msra.mxu0 0.0
      %1410 = vmatprep.subr.mxu0 0.0
      %1411 = vmatpush1.msra.mxu0 0.0
      %1412 = vmatprep.subr.mxu0 0.0
      %1413 = vmatpush1.msra.mxu0 0.0
      %1414 = vmatprep.subr.mxu0 0.0
      %1415 = vmatpush1.msra.mxu0 0.0
      %1416 = vmatprep.subr.mxu0 0.0
      %1417 = vmatpush1.msra.mxu0 0.0
      %1418 = vmatprep.mubr.f32.mxu0 0.0
      %v1419 = vand.u32 %v1057, 4294901760
      %v1420 = vsub.f32 %v1057, %v1419
      %1421 = vmatmul.mubr.f32.gmra.mrb[0].mxu0 %v1420
      %v1422 = vpop.f32.mrb[0].mxu0
      %v1423 = vadd.f32 %v1305, %v1422
      %v1424 = vpop.f32.mrb[0].mxu0
      %1425 = vmatprep.mubr.f32.mxu0 0.0
      %v1426 = vand.u32 %v1060, 4294901760
      %v1427 = vsub.f32 %v1060, %v1426
      %1428 = vmatmul.mubr.f32.gmra.mrb[0].mxu0 %v1427
      %v1429 = vpop.f32.mrb[0].mxu0
      %v1430 = vadd.f32 %v1311, %v1429
      %v1431 = vpop.f32.mrb[0].mxu0
      %1432 = vmatprep.mubr.f32.mxu0 0.0
      %v1433 = vand.u32 %v1063, 4294901760
      %v1434 = vsub.f32 %v1063, %v1433
      %1435 = vmatmul.mubr.f32.gmra.mrb[0].mxu0 %v1434
      %v1436 = vpop.f32.mrb[0].mxu0
      %v1437 = vadd.f32 %v1317, %v1436
      %v1438 = vpop.f32.mrb[0].mxu0
      %1439 = vmatprep.mubr.f32.mxu0 0.0
      %v1440 = vand.u32 %v1066, 4294901760
      %v1441 = vsub.f32 %v1066, %v1440
      %1442 = vmatmul.mubr.f32.gmra.mrb[0].mxu0 %v1441
      %v1443 = vpop.f32.mrb[0].mxu0
      %v1444 = vadd.f32 %v1323, %v1443
      %v1445 = vpop.f32.mrb[0].mxu0
      %1446 = vmatprep.mubr.f32.mxu0 0.0
      %v1447 = vand.u32 %v1069, 4294901760
      %v1448 = vsub.f32 %v1069, %v1447
      %1449 = vmatmul.mubr.f32.gmra.mrb[0].mxu0 %v1448
      %v1450 = vpop.f32.mrb[0].mxu0
      %v1451 = vadd.f32 %v1329, %v1450
      %v1452 = vpop.f32.mrb[0].mxu0
      %1453 = vmatprep.mubr.f32.mxu0 0.0
      %v1454 = vand.u32 %v1072, 4294901760
      %v1455 = vsub.f32 %v1072, %v1454
      %1456 = vmatmul.mubr.f32.gmra.mrb[0].mxu0 %v1455
      %v1457 = vpop.f32.mrb[0].mxu0
      %v1458 = vadd.f32 %v1335, %v1457
      %v1459 = vpop.f32.mrb[0].mxu0
      %1460 = vmatprep.mubr.f32.mxu0 0.0
      %v1461 = vand.u32 %v1075, 4294901760
      %v1462 = vsub.f32 %v1075, %v1461
      %1463 = vmatmul.mubr.f32.gmra.mrb[0].mxu0 %v1462
      %v1464 = vpop.f32.mrb[0].mxu0
      %v1465 = vadd.f32 %v1341, %v1464
      %v1466 = vpop.f32.mrb[0].mxu0
      %1467 = vmatprep.mubr.f32.mxu0 0.0
      %v1468 = vand.u32 %v1078, 4294901760
      %v1469 = vsub.f32 %v1078, %v1468
      %1470 = vmatmul.mubr.f32.gmra.mrb[0].mxu0 %v1469
      %v1471 = vpop.f32.mrb[0].mxu0
      %v1472 = vadd.f32 %v1347, %v1471
      %v1473 = vpop.f32.mrb[0].mxu0
      %1474 = vdwg.mxu0
      %1475 = vmatprep.subr.mxu0 0.0
      %v1476 = vand.u32 %v1053, 4294901760
      %1477 = vmatpush1.msra.mxu0 %v1476
      %1478 = vmatprep.subr.mxu0 0.0
      %v1479 = vand.u32 %v1054, 4294901760
      %1480 = vmatpush1.msra.mxu0 %v1479
      %1481 = vmatprep.subr.mxu0 0.0
      %1482 = vmatpush1.msra.mxu0 0.0
      %1483 = vmatprep.subr.mxu0 0.0
      %1484 = vmatpush1.msra.mxu0 0.0
      %1485 = vmatprep.subr.mxu0 0.0
      %1486 = vmatpush1.msra.mxu0 0.0
      %1487 = vmatprep.subr.mxu0 0.0
      %1488 = vmatpush1.msra.mxu0 0.0
      %1489 = vmatprep.subr.mxu0 0.0
      %1490 = vmatpush1.msra.mxu0 0.0
      %1491 = vmatprep.subr.mxu0 0.0
      %1492 = vmatpush1.msra.mxu0 0.0
      %1493 = vmatprep.subr.mxu0 0.0
      %1494 = vmatpush1.msra.mxu0 0.0
      %1495 = vmatprep.subr.mxu0 0.0
      %1496 = vmatpush1.msra.mxu0 0.0
      %1497 = vmatprep.subr.mxu0 0.0
      %1498 = vmatpush1.msra.mxu0 0.0
      %1499 = vmatprep.subr.mxu0 0.0
      %1500 = vmatpush1.msra.mxu0 0.0
      %1501 = vmatprep.subr.mxu0 0.0
      %1502 = vmatpush1.msra.mxu0 0.0
      %1503 = vmatprep.subr.mxu0 0.0
      %1504 = vmatpush1.msra.mxu0 0.0
      %1505 = vmatprep.subr.mxu0 0.0
      %1506 = vmatpush1.msra.mxu0 0.0
      %1507 = vmatprep.subr.mxu0 0.0
      %1508 = vmatpush1.msra.mxu0 0.0
      %1509 = vmatprep.subr.mxu0 0.0
      %1510 = vmatpush1.msra.mxu0 0.0
      %1511 = vmatprep.subr.mxu0 0.0
      %1512 = vmatpush1.msra.mxu0 0.0
      %1513 = vmatprep.subr.mxu0 0.0
      %1514 = vmatpush1.msra.mxu0 0.0
      %1515 = vmatprep.subr.mxu0 0.0
      %1516 = vmatpush1.msra.mxu0 0.0
      %1517 = vmatprep.subr.mxu0 0.0
      %1518 = vmatpush1.msra.mxu0 0.0
      %1519 = vmatprep.subr.mxu0 0.0
      %1520 = vmatpush1.msra.mxu0 0.0
      %1521 = vmatprep.subr.mxu0 0.0
      %1522 = vmatpush1.msra.mxu0 0.0
      %1523 = vmatprep.subr.mxu0 0.0
      %1524 = vmatpush1.msra.mxu0 0.0
      %1525 = vmatprep.subr.mxu0 0.0
      %1526 = vmatpush1.msra.mxu0 0.0
      %1527 = vmatprep.subr.mxu0 0.0
      %1528 = vmatpush1.msra.mxu0 0.0
      %1529 = vmatprep.subr.mxu0 0.0
      %1530 = vmatpush1.msra.mxu0 0.0
      %1531 = vmatprep.subr.mxu0 0.0
      %1532 = vmatpush1.msra.mxu0 0.0
      %1533 = vmatprep.subr.mxu0 0.0
      %1534 = vmatpush1.msra.mxu0 0.0
      %1535 = vmatprep.subr.mxu0 0.0
      %1536 = vmatpush1.msra.mxu0 0.0
      %1537 = vmatprep.subr.mxu0 0.0
      %1538 = vmatpush1.msra.mxu0 0.0
      %1539 = vmatprep.subr.mxu0 0.0
      %1540 = vmatpush1.msra.mxu0 0.0
      %1541 = vmatprep.mubr.f32.mxu0 0.0
      %v1542 = vand.u32 %v1057, 4294901760
      %v1543 = vsub.f32 %v1057, %v1542
      %v1544 = vand.u32 %v1543, 4294901760
      %1545 = vmatmul.mubr.f32.gmra.mrb[0].mxu0 %v1544
      %v1546 = vpop.f32.mrb[0].mxu0
      %v1547 = vadd.f32 %v1423, %v1546
      %v1548 = vpop.f32.mrb[0].mxu0
      %1549 = vmatprep.mubr.f32.mxu0 0.0
      %v1550 = vand.u32 %v1060, 4294901760
      %v1551 = vsub.f32 %v1060, %v1550
      %v1552 = vand.u32 %v1551, 4294901760
      %1553 = vmatmul.mubr.f32.gmra.mrb[0].mxu0 %v1552
      %v1554 = vpop.f32.mrb[0].mxu0
      %v1555 = vadd.f32 %v1430, %v1554
      %v1556 = vpop.f32.mrb[0].mxu0
      %1557 = vmatprep.mubr.f32.mxu0 0.0
      %v1558 = vand.u32 %v1063, 4294901760
      %v1559 = vsub.f32 %v1063, %v1558
      %v1560 = vand.u32 %v1559, 4294901760
      %1561 = vmatmul.mubr.f32.gmra.mrb[0].mxu0 %v1560
      %v1562 = vpop.f32.mrb[0].mxu0
      %v1563 = vadd.f32 %v1437, %v1562
      %v1564 = vpop.f32.mrb[0].mxu0
      %1565 = vmatprep.mubr.f32.mxu0 0.0
      %v1566 = vand.u32 %v1066, 4294901760
      %v1567 = vsub.f32 %v1066, %v1566
      %v1568 = vand.u32 %v1567, 4294901760
      %1569 = vmatmul.mubr.f32.gmra.mrb[0].mxu0 %v1568
      %v1570 = vpop.f32.mrb[0].mxu0
      %v1571 = vadd.f32 %v1444, %v1570
      %v1572 = vpop.f32.mrb[0].mxu0
      %1573 = vmatprep.mubr.f32.mxu0 0.0
      %v1574 = vand.u32 %v1069, 4294901760
      %v1575 = vsub.f32 %v1069, %v1574
      %v1576 = vand.u32 %v1575, 4294901760
      %1577 = vmatmul.mubr.f32.gmra.mrb[0].mxu0 %v1576
      %v1578 = vpop.f32.mrb[0].mxu0
      %v1579 = vadd.f32 %v1451, %v1578
      %v1580 = vpop.f32.mrb[0].mxu0
      %1581 = vmatprep.mubr.f32.mxu0 0.0
      %v1582 = vand.u32 %v1072, 4294901760
      %v1583 = vsub.f32 %v1072, %v1582
      %v1584 = vand.u32 %v1583, 4294901760
      %1585 = vmatmul.mubr.f32.gmra.mrb[0].mxu0 %v1584
      %v1586 = vpop.f32.mrb[0].mxu0
      %v1587 = vadd.f32 %v1458, %v1586
      %v1588 = vpop.f32.mrb[0].mxu0
      %1589 = vmatprep.mubr.f32.mxu0 0.0
      %v1590 = vand.u32 %v1075, 4294901760
      %v1591 = vsub.f32 %v1075, %v1590
      %v1592 = vand.u32 %v1591, 4294901760
      %1593 = vmatmul.mubr.f32.gmra.mrb[0].mxu0 %v1592
      %v1594 = vpop.f32.mrb[0].mxu0
      %v1595 = vadd.f32 %v1465, %v1594
      %v1596 = vpop.f32.mrb[0].mxu0
      %1597 = vmatprep.mubr.f32.mxu0 0.0
      %v1598 = vand.u32 %v1078, 4294901760
      %v1599 = vsub.f32 %v1078, %v1598
      %v1600 = vand.u32 %v1599, 4294901760
      %1601 = vmatmul.mubr.f32.gmra.mrb[0].mxu0 %v1600
      %v1602 = vpop.f32.mrb[0].mxu0
      %v1603 = vadd.f32 %v1472, %v1602
      %v1604 = vpop.f32.mrb[0].mxu0
      %1605 = vdwg.mxu0
      %1606 = vmatprep.subr.mxu0 0.0
      %v1607 = vand.u32 %v1053, 4294901760
      %v1608 = vsub.f32 %v1053, %v1607
      %v1609 = vand.u32 %v1608, 4294901760
      %1610 = vmatpush1.msra.mxu0 %v1609
      %1611 = vmatprep.subr.mxu0 0.0
      %v1612 = vand.u32 %v1054, 4294901760
      %v1613 = vsub.f32 %v1054, %v1612
      %v1614 = vand.u32 %v1613, 4294901760
      %1615 = vmatpush1.msra.mxu0 %v1614
      %1616 = vmatprep.subr.mxu0 0.0
      %1617 = vmatpush1.msra.mxu0 0.0
      %1618 = vmatprep.subr.mxu0 0.0
      %1619 = vmatpush1.msra.mxu0 0.0
      %1620 = vmatprep.subr.mxu0 0.0
      %1621 = vmatpush1.msra.mxu0 0.0
      %1622 = vmatprep.subr.mxu0 0.0
      %1623 = vmatpush1.msra.mxu0 0.0
      %1624 = vmatprep.subr.mxu0 0.0
      %1625 = vmatpush1.msra.mxu0 0.0
      %1626 = vmatprep.subr.mxu0 0.0
      %1627 = vmatpush1.msra.mxu0 0.0
      %1628 = vmatprep.subr.mxu0 0.0
      %1629 = vmatpush1.msra.mxu0 0.0
      %1630 = vmatprep.subr.mxu0 0.0
      %1631 = vmatpush1.msra.mxu0 0.0
      %1632 = vmatprep.subr.mxu0 0.0
      %1633 = vmatpush1.msra.mxu0 0.0
      %1634 = vmatprep.subr.mxu0 0.0
      %1635 = vmatpush1.msra.mxu0 0.0
      %1636 = vmatprep.subr.mxu0 0.0
      %1637 = vmatpush1.msra.mxu0 0.0
      %1638 = vmatprep.subr.mxu0 0.0
      %1639 = vmatpush1.msra.mxu0 0.0
      %1640 = vmatprep.subr.mxu0 0.0
      %1641 = vmatpush1.msra.mxu0 0.0
      %1642 = vmatprep.subr.mxu0 0.0
      %1643 = vmatpush1.msra.mxu0 0.0
      %1644 = vmatprep.subr.mxu0 0.0
      %1645 = vmatpush1.msra.mxu0 0.0
      %1646 = vmatprep.subr.mxu0 0.0
      %1647 = vmatpush1.msra.mxu0 0.0
      %1648 = vmatprep.subr.mxu0 0.0
      %1649 = vmatpush1.msra.mxu0 0.0
      %1650 = vmatprep.subr.mxu0 0.0
      %1651 = vmatpush1.msra.mxu0 0.0
      %1652 = vmatprep.subr.mxu0 0.0
      %1653 = vmatpush1.msra.mxu0 0.0
      %1654 = vmatprep.subr.mxu0 0.0
      %1655 = vmatpush1.msra.mxu0 0.0
      %1656 = vmatprep.subr.mxu0 0.0
      %1657 = vmatpush1.msra.mxu0 0.0
      %1658 = vmatprep.subr.mxu0 0.0
      %1659 = vmatpush1.msra.mxu0 0.0
      %1660 = vmatprep.subr.mxu0 0.0
      %1661 = vmatpush1.msra.mxu0 0.0
      %1662 = vmatprep.subr.mxu0 0.0
      %1663 = vmatpush1.msra.mxu0 0.0
      %1664 = vmatprep.subr.mxu0 0.0
      %1665 = vmatpush1.msra.mxu0 0.0
      %1666 = vmatprep.subr.mxu0 0.0
      %1667 = vmatpush1.msra.mxu0 0.0
      %1668 = vmatprep.subr.mxu0 0.0
      %1669 = vmatpush1.msra.mxu0 0.0
      %1670 = vmatprep.subr.mxu0 0.0
      %1671 = vmatpush1.msra.mxu0 0.0
      %1672 = vmatprep.subr.mxu0 0.0
      %1673 = vmatpush1.msra.mxu0 0.0
      %1674 = vmatprep.subr.mxu0 0.0
      %1675 = vmatpush1.msra.mxu0 0.0
      %1676 = vmatprep.mubr.f32.mxu0 0.0
      %v1677 = vand.u32 %v1057, 4294901760
      %1678 = vmatmul.mubr.f32.gmra.mrb[0].mxu0 %v1677
      %v1679 = vpop.f32.mrb[0].mxu0
      %v1680 = vadd.f32 %v1547, %v1679
      %v1681 = vpop.f32.mrb[0].mxu0
      %1682 = vmatprep.mubr.f32.mxu0 0.0
      %v1683 = vand.u32 %v1060, 4294901760
      %1684 = vmatmul.mubr.f32.gmra.mrb[0].mxu0 %v1683
      %v1685 = vpop.f32.mrb[0].mxu0
      %v1686 = vadd.f32 %v1555, %v1685
      %v1687 = vpop.f32.mrb[0].mxu0
      %1688 = vmatprep.mubr.f32.mxu0 0.0
      %v1689 = vand.u32 %v1063, 4294901760
      %1690 = vmatmul.mubr.f32.gmra.mrb[0].mxu0 %v1689
      %v1691 = vpop.f32.mrb[0].mxu0
      %v1692 = vadd.f32 %v1563, %v1691
      %v1693 = vpop.f32.mrb[0].mxu0
      %1694 = vmatprep.mubr.f32.mxu0 0.0
      %v1695 = vand.u32 %v1066, 4294901760
      %1696 = vmatmul.mubr.f32.gmra.mrb[0].mxu0 %v1695
      %v1697 = vpop.f32.mrb[0].mxu0
      %v1698 = vadd.f32 %v1571, %v1697
      %v1699 = vpop.f32.mrb[0].mxu0
      %1700 = vmatprep.mubr.f32.mxu0 0.0
      %v1701 = vand.u32 %v1069, 4294901760
      %1702 = vmatmul.mubr.f32.gmra.mrb[0].mxu0 %v1701
      %v1703 = vpop.f32.mrb[0].mxu0
      %v1704 = vadd.f32 %v1579, %v1703
      %v1705 = vpop.f32.mrb[0].mxu0
      %1706 = vmatprep.mubr.f32.mxu0 0.0
      %v1707 = vand.u32 %v1072, 4294901760
      %1708 = vmatmul.mubr.f32.gmra.mrb[0].mxu0 %v1707
      %v1709 = vpop.f32.mrb[0].mxu0
      %v1710 = vadd.f32 %v1587, %v1709
      %v1711 = vpop.f32.mrb[0].mxu0
      %1712 = vmatprep.mubr.f32.mxu0 0.0
      %v1713 = vand.u32 %v1075, 4294901760
      %1714 = vmatmul.mubr.f32.gmra.mrb[0].mxu0 %v1713
      %v1715 = vpop.f32.mrb[0].mxu0
      %v1716 = vadd.f32 %v1595, %v1715
      %v1717 = vpop.f32.mrb[0].mxu0
      %1718 = vmatprep.mubr.f32.mxu0 0.0
      %v1719 = vand.u32 %v1078, 4294901760
      %1720 = vmatmul.mubr.f32.gmra.mrb[0].mxu0 %v1719
      %v1721 = vpop.f32.mrb[0].mxu0
      %v1722 = vadd.f32 %v1603, %v1721
      %v1723 = vpop.f32.mrb[0].mxu0
      %1724 = vdwg.mxu0
      %1725 = vmatprep.subr.mxu0 0.0
      %v1726 = vand.u32 %v1053, 4294901760
      %1727 = vmatpush1.msra.mxu0 %v1726
      %1728 = vmatprep.subr.mxu0 0.0
      %v1729 = vand.u32 %v1054, 4294901760
      %1730 = vmatpush1.msra.mxu0 %v1729
      %1731 = vmatprep.subr.mxu0 0.0
      %1732 = vmatpush1.msra.mxu0 0.0
      %1733 = vmatprep.subr.mxu0 0.0
      %1734 = vmatpush1.msra.mxu0 0.0
      %1735 = vmatprep.subr.mxu0 0.0
      %1736 = vmatpush1.msra.mxu0 0.0
      %1737 = vmatprep.subr.mxu0 0.0
      %1738 = vmatpush1.msra.mxu0 0.0
      %1739 = vmatprep.subr.mxu0 0.0
      %1740 = vmatpush1.msra.mxu0 0.0
      %1741 = vmatprep.subr.mxu0 0.0
      %1742 = vmatpush1.msra.mxu0 0.0
      %1743 = vmatprep.subr.mxu0 0.0
      %1744 = vmatpush1.msra.mxu0 0.0
      %1745 = vmatprep.subr.mxu0 0.0
      %1746 = vmatpush1.msra.mxu0 0.0
      %1747 = vmatprep.subr.mxu0 0.0
      %1748 = vmatpush1.msra.mxu0 0.0
      %1749 = vmatprep.subr.mxu0 0.0
      %1750 = vmatpush1.msra.mxu0 0.0
      %1751 = vmatprep.subr.mxu0 0.0
      %1752 = vmatpush1.msra.mxu0 0.0
      %1753 = vmatprep.subr.mxu0 0.0
      %1754 = vmatpush1.msra.mxu0 0.0
      %1755 = vmatprep.subr.mxu0 0.0
      %1756 = vmatpush1.msra.mxu0 0.0
      %1757 = vmatprep.subr.mxu0 0.0
      %1758 = vmatpush1.msra.mxu0 0.0
      %1759 = vmatprep.subr.mxu0 0.0
      %1760 = vmatpush1.msra.mxu0 0.0
      %1761 = vmatprep.subr.mxu0 0.0
      %1762 = vmatpush1.msra.mxu0 0.0
      %1763 = vmatprep.subr.mxu0 0.0
      %1764 = vmatpush1.msra.mxu0 0.0
      %1765 = vmatprep.subr.mxu0 0.0
      %1766 = vmatpush1.msra.mxu0 0.0
      %1767 = vmatprep.subr.mxu0 0.0
      %1768 = vmatpush1.msra.mxu0 0.0
      %1769 = vmatprep.subr.mxu0 0.0
      %1770 = vmatpush1.msra.mxu0 0.0
      %1771 = vmatprep.subr.mxu0 0.0
      %1772 = vmatpush1.msra.mxu0 0.0
      %1773 = vmatprep.subr.mxu0 0.0
      %1774 = vmatpush1.msra.mxu0 0.0
      %1775 = vmatprep.subr.mxu0 0.0
      %1776 = vmatpush1.msra.mxu0 0.0
      %1777 = vmatprep.subr.mxu0 0.0
      %1778 = vmatpush1.msra.mxu0 0.0
      %1779 = vmatprep.subr.mxu0 0.0
      %1780 = vmatpush1.msra.mxu0 0.0
      %1781 = vmatprep.subr.mxu0 0.0
      %1782 = vmatpush1.msra.mxu0 0.0
      %1783 = vmatprep.subr.mxu0 0.0
      %1784 = vmatpush1.msra.mxu0 0.0
      %1785 = vmatprep.subr.mxu0 0.0
      %1786 = vmatpush1.msra.mxu0 0.0
      %1787 = vmatprep.subr.mxu0 0.0
      %1788 = vmatpush1.msra.mxu0 0.0
      %1789 = vmatprep.subr.mxu0 0.0
      %1790 = vmatpush1.msra.mxu0 0.0
      %1791 = vmatprep.mubr.f32.mxu0 0.0
      %v1792 = vand.u32 %v1057, 4294901760
      %1793 = vmatmul.mubr.f32.gmra.mrb[0].mxu0 %v1792
      %v1794 = vpop.f32.mrb[0].mxu0
      %v1795 = vadd.f32 %v1680, %v1794
      %v1796 = vpop.f32.mrb[0].mxu0
      %1797 = vmatprep.mubr.f32.mxu0 0.0
      %v1798 = vand.u32 %v1060, 4294901760
      %1799 = vmatmul.mubr.f32.gmra.mrb[0].mxu0 %v1798
      %v1800 = vpop.f32.mrb[0].mxu0
      %v1801 = vadd.f32 %v1686, %v1800
      %v1802 = vpop.f32.mrb[0].mxu0
      %1803 = vmatprep.mubr.f32.mxu0 0.0
      %v1804 = vand.u32 %v1063, 4294901760
      %1805 = vmatmul.mubr.f32.gmra.mrb[0].mxu0 %v1804
      %v1806 = vpop.f32.mrb[0].mxu0
      %v1807 = vadd.f32 %v1692, %v1806
      %v1808 = vpop.f32.mrb[0].mxu0
      %1809 = vmatprep.mubr.f32.mxu0 0.0
      %v1810 = vand.u32 %v1066, 4294901760
      %1811 = vmatmul.mubr.f32.gmra.mrb[0].mxu0 %v1810
      %v1812 = vpop.f32.mrb[0].mxu0
      %v1813 = vadd.f32 %v1698, %v1812
      %v1814 = vpop.f32.mrb[0].mxu0
      %1815 = vmatprep.mubr.f32.mxu0 0.0
      %v1816 = vand.u32 %v1069, 4294901760
      %1817 = vmatmul.mubr.f32.gmra.mrb[0].mxu0 %v1816
      %v1818 = vpop.f32.mrb[0].mxu0
      %v1819 = vadd.f32 %v1704, %v1818
      %v1820 = vpop.f32.mrb[0].mxu0
      %1821 = vmatprep.mubr.f32.mxu0 0.0
      %v1822 = vand.u32 %v1072, 4294901760
      %1823 = vmatmul.mubr.f32.gmra.mrb[0].mxu0 %v1822
      %v1824 = vpop.f32.mrb[0].mxu0
      %v1825 = vadd.f32 %v1710, %v1824
      %v1826 = vpop.f32.mrb[0].mxu0
      %1827 = vmatprep.mubr.f32.mxu0 0.0
      %v1828 = vand.u32 %v1075, 4294901760
      %1829 = vmatmul.mubr.f32.gmra.mrb[0].mxu0 %v1828
      %v1830 = vpop.f32.mrb[0].mxu0
      %v1831 = vadd.f32 %v1716, %v1830
      %v1832 = vpop.f32.mrb[0].mxu0
      %1833 = vmatprep.mubr.f32.mxu0 0.0
      %v1834 = vand.u32 %v1078, 4294901760
      %1835 = vmatmul.mubr.f32.gmra.mrb[0].mxu0 %v1834
      %v1836 = vpop.f32.mrb[0].mxu0
      %v1837 = vadd.f32 %v1722, %v1836
      %v1838 = vpop.f32.mrb[0].mxu0
      %1839 = vdwg.mxu0
      %1840 = vst.msk [vmem:[%s172] sm:$0xff] %vm1055, %v1795
      %1841 = vst.msk [vmem:[%s172 + $0x8] sm:$0xff] %vm1055, %v1801
      %1842 = vst.msk [vmem:[%s172 + $0x10] sm:$0xff] %vm1055, %v1807
      %1843 = vst.msk [vmem:[%s172 + $0x18] sm:$0xff] %vm1055, %v1813
      %1844 = vst.msk [vmem:[%s172 + $0x20] sm:$0xff] %vm1055, %v1819
      %1845 = vst.msk [vmem:[%s172 + $0x28] sm:$0xff] %vm1055, %v1825
      %1846 = vst.msk [vmem:[%s172 + $0x30] sm:$0xff] %vm1055, %v1831
      %1847 = vst.msk [vmem:[%s172 + $0x38] sm:$0xff] %vm1055, %v1837
      %s1848 = smul.u32 8, %s14
      %p1849 = scmp.lt.s32.totalorder %s1848, 15
      %s1850 = scalar_select %p1849, %s1848, 15
      %s1851 = smul.addr %s1850, 8
      %s1852 = scalar_lea.vmem %s3, %s1851
      // Predicated region
      $region33: #{tpu_custom_call.1} parent=31 // pred_check
        %p1853 = pneg %p100
      $region34: #{tpu_custom_call.1} parent=31 // pred_check_branch
        %1855 = sbr.rel (%p1853) target = $region36
      $region35: #{tpu_custom_call.1} parent=31 // pred_region
        %s1856 = smul.u32 8, %s14
      $region36: #{tpu_custom_call.1} parent=31 // pred_fallthru
        _
    $region32: #{tpu_custom_call.1} parent=5 // pred_fallthru
      _
    %p1857 = scmp.le.s32.totalorder 2, %s9
    // Predicated region
    $region37: #{tpu_custom_call.1} parent=5 // pred_check
      %p1858 = pneg %p1857
    $region38: #{tpu_custom_call.1} parent=5 // pred_check_branch
      %1860 = sbr.rel (%p1858) target = $region40
    $region39: #{tpu_custom_call.1} parent=5 // pred_region
      %s1861 = ssub.s32 %s9, 2
      // Predicated region
      $region41: #{tpu_custom_call.1} parent=39 // pred_check
        %p1862 = pneg %p106
      $region42: #{tpu_custom_call.1} parent=39 // pred_check_branch
        %1864 = sbr.rel (%p1862) target = $region44
      $region43: #{tpu_custom_call.1} parent=39 // pred_region
        %s1865 = smul.u32 8, %s15
        %p1866 = scmp.lt.s32.totalorder %s1865, 15
        %s1867 = scalar_select %p1866, %s1865, 15
        %s1868 = smul.addr %s1867, 8
        %s1869 = scalar_lea.vmem %s3, %s1868
      $region44: #{tpu_custom_call.1} parent=39 // pred_fallthru
        _
    $region40: #{tpu_custom_call.1} parent=5 // pred_fallthru
      _
  $region6: #{tpu_custom_call.1} parent=0 // loop_footer
    %s13 = sadd.s32 1, %s9
  $region7: #{tpu_custom_call.1} parent=0 // loop_footer_branch
    %8 = sbr.rel target = $region3
  $region8: #{tpu_custom_call.1} parent=0 // loop_exit
    _

</llo_original>
